<compile_context>
chip_gen: v5e
topology: v5e:2x2
jax: 0.10.0
libtpu: 0.0.40
codegen_flags: <defaults>
</compile_context>

<pallas_src>
import functools

import jax
import jax.numpy as jnp
from jax.experimental import pallas as pl
from jax.experimental.pallas import tpu as pltpu


def _vmem_capacity_bytes():
    """Per-core VMEM capacity; conservative (v7x-sized) fallback off-TPU."""
    try:
        return int(pltpu.get_tpu_info().vmem_capacity_bytes)
    except Exception:
        return 64 * 1024 * 1024


def _pick_row_tile(H, W, Cin, Cout_pad, cmp_bytes, out_bytes, patch_factor,
                   vmem_budget, max_row_tile=None):
    """Largest row tile (divisor of H) whose per-step VMEM footprint fits."""
    divisors = sorted((d for d in range(1, H + 1) if H % d == 0), reverse=True)
    for th in divisors:
        if max_row_tile is not None and th > max_row_tile:
            continue
        per_step = (
            2 * th * W * Cin * cmp_bytes                # input row tile (x2 buffers)
            + 4 * W * Cin * cmp_bytes                   # 2 halo rows (x2 buffers)
            + (th + 2) * (W + 2) * Cin * cmp_bytes      # activation window scratch
            + th * W * patch_factor * Cin * cmp_bytes   # matmul LHS (im2col: 9x)
            + th * W * Cout_pad * 4                     # f32 accumulator
            + 2 * th * W * Cout_pad * out_bytes         # output tile (x2 buffers)
            + 2 * 9 * Cin * Cout_pad * cmp_bytes        # resident conv weights
        )
        if per_step <= vmem_budget:
            return th
    return 1


def _densenet_layer_kernel(xc_ref, xt_ref, xb_ref, scale_ref, shift_ref,
                           w_ref, b_ref, o_ref, win_ref, *,
                           use_im2col, compute_dtype):
    # xc_ref:  (1, TH, W, Cin)   row tile of the (unpadded) NHWC input
    # xt_ref:  (1, 1, W, Cin)    row just above the tile (clamped at the edge)
    # xb_ref:  (1, 1, W, Cin)    row just below the tile (clamped at the edge)
    # scale_ref/shift_ref: (1, Cin) f32 folded BatchNorm affine
    # w_ref:   (9*Cin, Cout_p) [im2col] or (9, Cin, Cout_p) [per-tap]
    # b_ref:   (1, Cout_p) f32 conv bias (zero-padded)
    # o_ref:   (1, TH, W, Cout_p) output row tile
    # win_ref: (TH+2, W+2, Cin) VMEM scratch: zero-padded post-BN/ReLU window
    TH, W, Cout_p = o_ref.shape[1], o_ref.shape[2], o_ref.shape[3]
    Cin = xc_ref.shape[3]

    r = pl.program_id(1)
    last_r = pl.num_programs(1) - 1

    scale = scale_ref[...]                     # (1, Cin) f32
    shift = shift_ref[...]

    def bn_relu(v):                            # folded BN + ReLU, f32 math
        a = jnp.maximum(v.astype(jnp.float32) * scale + shift, 0.0)
        return a.astype(compute_dtype)

    # Assemble the zero-padded activation window for the 3x3 "same" conv.
    zcol = jnp.zeros((TH + 2, 1, Cin), compute_dtype)
    win_ref[:, 0:1, :] = zcol                              # left  pad column
    win_ref[:, W + 1:W + 2, :] = zcol                      # right pad column
    win_ref[1:TH + 1, 1:W + 1, :] = bn_relu(xc_ref[0])     # interior rows
    top_keep = (r > 0).astype(compute_dtype)               # zero halo at edges
    bot_keep = (r < last_r).astype(compute_dtype)
    win_ref[0:1, 1:W + 1, :] = bn_relu(xt_ref[0]) * top_keep
    win_ref[TH + 1:TH + 2, 1:W + 1, :] = bn_relu(xb_ref[0]) * bot_keep

    if use_im2col:
        # Small-Cin layers: one MXU matmul with K = 9*Cin.
        taps = [win_ref[kh:kh + TH, kw:kw + W, :]
                for kh in range(3) for kw in range(3)]
        patches = jnp.concatenate(taps, axis=-1).reshape(TH * W, 9 * Cin)
        acc = jnp.dot(patches, w_ref[...], preferred_element_type=jnp.float32)
    else:
        # Lane-aligned large-Cin layers: nine accumulating dots with K = Cin —
        # no lane concat and no 9x im2col buffer.
        acc = jnp.zeros((TH * W, Cout_p), jnp.float32)
        for kh in range(3):
            for kw in range(3):
                lhs = win_ref[kh:kh + TH, kw:kw + W, :].reshape(TH * W, Cin)
                acc = acc + jnp.dot(lhs, w_ref[kh * 3 + kw],
                                    preferred_element_type=jnp.float32)

    acc = acc + b_ref[0].astype(jnp.float32)
    # Dropout(p=0.2): identity in inference mode.
    o_ref[0] = acc.reshape(TH, W, Cout_p).astype(o_ref.dtype)


def densenet_layer(x_nchw, gamma, beta, running_mean, running_var, w_oihw, bias,
                   *, eps=1e-5, compute_dtype=jnp.bfloat16,
                   out_dtype=jnp.float32, max_row_tile=None):
    """Forward pass of the DenseNet `Layer` (inference semantics).

    x_nchw: (N, Cin, H, W) f32   w_oihw: (Cout, Cin, 3, 3)   bias: (Cout,)
    Returns (N, Cout, H, W) in `out_dtype` (NCHW, matching the PyTorch module).
    """
    N, Cin, H, W = x_nchw.shape
    Cout = w_oihw.shape[0]
    Cout_pad = ((Cout + 127) // 128) * 128      # lane-dense output channels
    use_im2col = Cin < 128                      # small Cin -> single K=9*Cin dot

    # Fold BN (eval mode) into per-channel scale/shift, kept in f32.
    scale = (gamma / jnp.sqrt(running_var + eps)).astype(jnp.float32)   # (Cin,)
    shift = (beta - running_mean * scale).astype(jnp.float32)           # (Cin,)

    # Single wrapper HBM pass: NCHW -> NHWC + cast to the compute dtype.
    # No jnp.pad — the conv halo is built inside the kernel.
    x_nhwc = jnp.transpose(x_nchw, (0, 2, 3, 1)).astype(compute_dtype)

    # OIHW -> (kh, kw, Cin, Cout_pad), lane-padded Cout, compute dtype.
    w_hwio = jnp.transpose(w_oihw, (2, 3, 1, 0)).astype(jnp.float32)
    w_hwio = jnp.pad(w_hwio, ((0, 0), (0, 0), (0, 0), (0, Cout_pad - Cout)))
    if use_im2col:
        w_kernel = w_hwio.reshape(9 * Cin, Cout_pad).astype(compute_dtype)
        w_spec = pl.BlockSpec((9 * Cin, Cout_pad), lambda n, r: (0, 0))
    else:
        w_kernel = w_hwio.reshape(9, Cin, Cout_pad).astype(compute_dtype)
        w_spec = pl.BlockSpec((9, Cin, Cout_pad), lambda n, r: (0, 0, 0))
    b_pad = jnp.pad(bias.astype(jnp.float32), (0, Cout_pad - Cout))[None, :]

    # VMEM-aware row-tile selection and VMEM limit.
    cmp_bytes = jnp.dtype(compute_dtype).itemsize
    out_bytes = jnp.dtype(out_dtype).itemsize
    cap = _vmem_capacity_bytes()
    TH = _pick_row_tile(H, W, Cin, Cout_pad, cmp_bytes, out_bytes,
                        patch_factor=9 if use_im2col else 1,
                        vmem_budget=cap // 2, max_row_tile=max_row_tile)
    num_row_tiles = H // TH
    vmem_limit = min(int(cap * 0.8), cap - (4 << 20))

    in_specs = [
        # Center row tile (non-overlapping, auto-pipelined).
        pl.BlockSpec((1, TH, W, Cin), lambda n, r: (n, r, 0, 0)),
        # One-row halo blocks; block size 1 on H so the block index is the row
        # index, clamped at the image edges (edge tiles re-zero them).
        pl.BlockSpec((1, 1, W, Cin),
                     lambda n, r: (n, jnp.maximum(r * TH - 1, 0), 0, 0)),
        pl.BlockSpec((1, 1, W, Cin),
                     lambda n, r: (n, jnp.minimum(r * TH + TH, H - 1), 0, 0)),
        pl.BlockSpec((1, Cin), lambda n, r: (0, 0)),
        pl.BlockSpec((1, Cin), lambda n, r: (0, 0)),
        w_spec,
        pl.BlockSpec((1, Cout_pad), lambda n, r: (0, 0)),
    ]
    out_spec = pl.BlockSpec((1, TH, W, Cout_pad), lambda n, r: (n, r, 0, 0))

    out_nhwc = pl.pallas_call(
        functools.partial(_densenet_layer_kernel, use_im2col=use_im2col,
                          compute_dtype=compute_dtype),
        out_shape=jax.ShapeDtypeStruct((N, H, W, Cout_pad), out_dtype),
        grid_spec=pltpu.PrefetchScalarGridSpec(
            num_scalar_prefetch=0,
            grid=(N, num_row_tiles),
            in_specs=in_specs,
            out_specs=out_spec,
            scratch_shapes=[pltpu.VMEM((TH + 2, W + 2, Cin), compute_dtype)]),
        compiler_params=pltpu.CompilerParams(
            dimension_semantics=("parallel", "parallel"),
            vmem_limit_bytes=vmem_limit),
    )(x_nhwc, x_nhwc, x_nhwc, scale[None, :], shift[None, :], w_kernel, b_pad)

    # Back to the PyTorch module's layout (NCHW, un-padded channels).  A fused
    # DenseNet consumer would instead keep NHWC + padded channels (and bf16).
    return jnp.transpose(out_nhwc[..., :Cout], (0, 3, 1, 2))


def _reference(x, gamma, beta, rm, rv, w, b, eps=1e-5, quant_dtype=None):
    """Eval-mode BN -> ReLU -> Conv2d(3,1,1) -> Dropout(identity), pure JAX.

    With quant_dtype set, input/activations/weights are rounded to that dtype
    (mirroring the kernel's storage precision) but all arithmetic stays f32.
    """
    scale = gamma / jnp.sqrt(rv + eps)
    shift = beta - rm * scale
    xq = x if quant_dtype is None else x.astype(quant_dtype).astype(jnp.float32)
    xn = jnp.maximum(
        xq * scale[None, :, None, None] + shift[None, :, None, None], 0.0)
    wq = w
    if quant_dtype is not None:
        xn = xn.astype(quant_dtype).astype(jnp.float32)
        wq = w.astype(quant_dtype).astype(jnp.float32)
    y = jax.lax.conv_general_dilated(
        xn, wq, window_strides=(1, 1), padding=((1, 1), (1, 1)),
        dimension_numbers=("NCHW", "OIHW", "NCHW"),
        preferred_element_type=jnp.float32)
    return y + b[None, :, None, None]


def _run_case(name, key, N, Cin, Cout, H, W, max_row_tile=None):
    kx, kg, kb, km, kv, kw, kbi = jax.random.split(key, 7)
    x = jax.random.normal(kx, (N, Cin, H, W), jnp.float32)
    gamma = jax.random.normal(kg, (Cin,), jnp.float32) * 0.1 + 1.0
    beta = jax.random.normal(kb, (Cin,), jnp.float32) * 0.1
    rm = jax.random.normal(km, (Cin,), jnp.float32) * 0.1
    rv = jax.random.uniform(kv, (Cin,), jnp.float32, minval=0.5, maxval=1.5)
    w = jax.random.normal(kw, (Cout, Cin, 3, 3), jnp.float32) * 0.2
    b = jax.random.normal(kbi, (Cout,), jnp.float32) * 0.1

    out = densenet_layer(x, gamma, beta, rm, rv, w, b,
                         max_row_tile=max_row_tile)
    out = jax.block_until_ready(out)
    assert out.shape == (N, Cout, H, W), (name, out.shape)

    # Tight check vs. a reference with the kernel's bf16 storage rounding.
    ref_q = _reference(x, gamma, beta, rm, rv, w, b, quant_dtype=jnp.bfloat16)
    err_q = float(jnp.max(jnp.abs(out - ref_q)))
    assert jnp.allclose(out, ref_q, atol=1e-2, rtol=1e-2), (name, err_q)

    # Loose sanity check vs. the pure-f32 reference (bf16 rounding only).
    ref_f = _reference(x, gamma, beta, rm, rv, w, b)
    err_f = float(jnp.max(jnp.abs(out - ref_f)))
    assert jnp.allclose(out, ref_f, atol=1e-1, rtol=1e-1), (name, err_f)


if __name__ == "__main__":
    key0, key1 = jax.random.split(jax.random.PRNGKey(0))
    # Small-Cin config: im2col path, 2 row tiles per image (halo rows exercised).
    _run_case("im2col", key0, N=2, Cin=4, Cout=8, H=16, W=16, max_row_tile=8)
    # Lane-aligned-Cin config: per-tap accumulation path (no lane concat).
    _run_case("per_tap", key1, N=1, Cin=128, Cout=16, H=8, W=8)
    print("KERNEL_OK")
</pallas_src>

<mosaic_0001>
module attributes {stable_mosaic.version = 11 : i64} {
  func.func @_densenet_layer_kernel(%arg0: i32, %arg1: i32, %arg2: memref<1x8x16x4xbf16, #tpu.memory_space<vmem>>, %arg3: memref<1x1x16x4xbf16, #tpu.memory_space<vmem>>, %arg4: memref<1x1x16x4xbf16, #tpu.memory_space<vmem>>, %arg5: memref<1x4xf32, #tpu.memory_space<vmem>>, %arg6: memref<1x4xf32, #tpu.memory_space<vmem>>, %arg7: memref<36x128xbf16, #tpu.memory_space<vmem>>, %arg8: memref<1x128xf32, #tpu.memory_space<vmem>>, %arg9: memref<1x8x16x128xf32, #tpu.memory_space<vmem>>, %arg10: memref<10x18x4xbf16, #tpu.memory_space<vmem>>) attributes {dimension_semantics = [#tpu.dimension_semantics<parallel>, #tpu.dimension_semantics<parallel>], iteration_bounds = array<i64: 2, 2>, scalar_prefetch = 0 : i64, scratch_operands = 1 : i64, tpu.core_type = #tpu.core_type<tc>, window_params = [{transform_indices = @transform_0, window_bounds = array<i64: 1, 8, 16, 4>}, {transform_indices = @transform_1, window_bounds = array<i64: 1, 1, 16, 4>}, {transform_indices = @transform_2, window_bounds = array<i64: 1, 1, 16, 4>}, {pipeline_mode = #tpu.pipeline_mode<synchronous>, transform_indices = @transform_3, window_bounds = array<i64: 1, 4>}, {pipeline_mode = #tpu.pipeline_mode<synchronous>, transform_indices = @transform_4, window_bounds = array<i64: 1, 4>}, {pipeline_mode = #tpu.pipeline_mode<synchronous>, transform_indices = @transform_5, window_bounds = array<i64: 36, 128>}, {pipeline_mode = #tpu.pipeline_mode<synchronous>, transform_indices = @transform_6, window_bounds = array<i64: 1, 128>}, {transform_indices = @transform_7, window_bounds = array<i64: 1, 8, 16, 128>}]} {
    %c0 = arith.constant 0 : index
    %c0_0 = arith.constant 0 : index
    %0 = vector.load %arg5[%c0, %c0_0] : memref<1x4xf32, #tpu.memory_space<vmem>>, vector<1x4xf32>
    %c0_1 = arith.constant 0 : index
    %c0_2 = arith.constant 0 : index
    %1 = vector.load %arg6[%c0_1, %c0_2] : memref<1x4xf32, #tpu.memory_space<vmem>>, vector<1x4xf32>
    %cst = arith.constant 0.000000e+00 : bf16
    %2 = vector.broadcast %cst : bf16 to vector<10x1x4xbf16>
    %c0_3 = arith.constant 0 : index
    %c0_4 = arith.constant 0 : index
    %c0_5 = arith.constant 0 : index
    %3 = vector.load %arg10[%c0_3, %c0_4, %c0_5] : memref<10x18x4xbf16, #tpu.memory_space<vmem>>, vector<10x1x4xbf16>
    tpu.vector_store %arg10[%c0_3, %c0_4, %c0_5], %2 {strides = array<i32>} : memref<10x18x4xbf16, #tpu.memory_space<vmem>>, vector<10x1x4xbf16>,
    %c0_6 = arith.constant 0 : index
    %c17 = arith.constant 17 : index
    %c0_7 = arith.constant 0 : index
    %4 = vector.load %arg10[%c0_6, %c17, %c0_7] : memref<10x18x4xbf16, #tpu.memory_space<vmem>>, vector<10x1x4xbf16>
    tpu.vector_store %arg10[%c0_6, %c17, %c0_7], %2 {strides = array<i32>} : memref<10x18x4xbf16, #tpu.memory_space<vmem>>, vector<10x1x4xbf16>,
    %c0_8 = arith.constant 0 : index
    %c0_9 = arith.constant 0 : index
    %c0_10 = arith.constant 0 : index
    %c0_11 = arith.constant 0 : index
    %5 = vector.load %arg2[%c0_8, %c0_9, %c0_10, %c0_11] : memref<1x8x16x4xbf16, #tpu.memory_space<vmem>>, vector<1x8x16x4xbf16>
    %6 = vector.shape_cast %5 : vector<1x8x16x4xbf16> to vector<8x16x4xbf16>
    %7 = arith.extf %6 : vector<8x16x4xbf16> to vector<8x16x4xf32>
    %8 = vector.shape_cast %0 : vector<1x4xf32> to vector<1x1x4xf32>
    %9 = vector.broadcast %8 : vector<1x1x4xf32> to vector<8x16x4xf32>
    %10 = arith.mulf %7, %9 : vector<8x16x4xf32>
    %11 = vector.shape_cast %1 : vector<1x4xf32> to vector<1x1x4xf32>
    %12 = vector.broadcast %11 : vector<1x1x4xf32> to vector<8x16x4xf32>
    %13 = arith.addf %10, %12 : vector<8x16x4xf32>
    %cst_12 = arith.constant 0.000000e+00 : f32
    %14 = vector.broadcast %cst_12 : f32 to vector<8x16x4xf32>
    %15 = arith.maximumf %13, %14 : vector<8x16x4xf32>
    %16 = arith.truncf %15 : vector<8x16x4xf32> to vector<8x16x4xbf16>
    %c1 = arith.constant 1 : index
    %c1_13 = arith.constant 1 : index
    %c0_14 = arith.constant 0 : index
    %17 = vector.load %arg10[%c1, %c1_13, %c0_14] : memref<10x18x4xbf16, #tpu.memory_space<vmem>>, vector<8x16x4xbf16>
    tpu.vector_store %arg10[%c1, %c1_13, %c0_14], %16 {strides = array<i32>} : memref<10x18x4xbf16, #tpu.memory_space<vmem>>, vector<8x16x4xbf16>,
    %c0_i32 = arith.constant 0 : i32
    %18 = arith.cmpi sgt, %arg1, %c0_i32 : i32
    %19 = arith.extui %18 : i1 to i32
    %20 = arith.sitofp %19 : i32 to f32
    %21 = arith.truncf %20 : f32 to bf16
    %c1_i32 = arith.constant 1 : i32
    %22 = arith.cmpi slt, %arg1, %c1_i32 : i32
    %23 = arith.extui %22 : i1 to i32
    %24 = arith.sitofp %23 : i32 to f32
    %25 = arith.truncf %24 : f32 to bf16
    %c0_15 = arith.constant 0 : index
    %c0_16 = arith.constant 0 : index
    %c0_17 = arith.constant 0 : index
    %c0_18 = arith.constant 0 : index
    %26 = vector.load %arg3[%c0_15, %c0_16, %c0_17, %c0_18] : memref<1x1x16x4xbf16, #tpu.memory_space<vmem>>, vector<1x1x16x4xbf16>
    %27 = vector.shape_cast %26 : vector<1x1x16x4xbf16> to vector<1x16x4xbf16>
    %28 = arith.extf %27 : vector<1x16x4xbf16> to vector<1x16x4xf32>
    %29 = vector.shape_cast %0 : vector<1x4xf32> to vector<1x1x4xf32>
    %30 = vector.broadcast %29 : vector<1x1x4xf32> to vector<1x16x4xf32>
    %31 = arith.mulf %28, %30 : vector<1x16x4xf32>
    %32 = vector.shape_cast %1 : vector<1x4xf32> to vector<1x1x4xf32>
    %33 = vector.broadcast %32 : vector<1x1x4xf32> to vector<1x16x4xf32>
    %34 = arith.addf %31, %33 : vector<1x16x4xf32>
    %cst_19 = arith.constant 0.000000e+00 : f32
    %35 = vector.broadcast %cst_19 : f32 to vector<1x16x4xf32>
    %36 = arith.maximumf %34, %35 : vector<1x16x4xf32>
    %37 = arith.truncf %36 : vector<1x16x4xf32> to vector<1x16x4xbf16>
    %38 = vector.broadcast %21 : bf16 to vector<1x16x4xbf16>
    %39 = arith.mulf %37, %38 : vector<1x16x4xbf16>
    %c0_20 = arith.constant 0 : index
    %c1_21 = arith.constant 1 : index
    %c0_22 = arith.constant 0 : index
    %40 = vector.load %arg10[%c0_20, %c1_21, %c0_22] : memref<10x18x4xbf16, #tpu.memory_space<vmem>>, vector<1x16x4xbf16>
    tpu.vector_store %arg10[%c0_20, %c1_21, %c0_22], %39 {strides = array<i32>} : memref<10x18x4xbf16, #tpu.memory_space<vmem>>, vector<1x16x4xbf16>,
    %c0_23 = arith.constant 0 : index
    %c0_24 = arith.constant 0 : index
    %c0_25 = arith.constant 0 : index
    %c0_26 = arith.constant 0 : index
    %41 = vector.load %arg4[%c0_23, %c0_24, %c0_25, %c0_26] : memref<1x1x16x4xbf16, #tpu.memory_space<vmem>>, vector<1x1x16x4xbf16>
    %42 = vector.shape_cast %41 : vector<1x1x16x4xbf16> to vector<1x16x4xbf16>
    %43 = arith.extf %42 : vector<1x16x4xbf16> to vector<1x16x4xf32>
    %44 = vector.shape_cast %0 : vector<1x4xf32> to vector<1x1x4xf32>
    %45 = vector.broadcast %44 : vector<1x1x4xf32> to vector<1x16x4xf32>
    %46 = arith.mulf %43, %45 : vector<1x16x4xf32>
    %47 = vector.shape_cast %1 : vector<1x4xf32> to vector<1x1x4xf32>
    %48 = vector.broadcast %47 : vector<1x1x4xf32> to vector<1x16x4xf32>
    %49 = arith.addf %46, %48 : vector<1x16x4xf32>
    %cst_27 = arith.constant 0.000000e+00 : f32
    %50 = vector.broadcast %cst_27 : f32 to vector<1x16x4xf32>
    %51 = arith.maximumf %49, %50 : vector<1x16x4xf32>
    %52 = arith.truncf %51 : vector<1x16x4xf32> to vector<1x16x4xbf16>
    %53 = vector.broadcast %25 : bf16 to vector<1x16x4xbf16>
    %54 = arith.mulf %52, %53 : vector<1x16x4xbf16>
    %c9 = arith.constant 9 : index
    %c1_28 = arith.constant 1 : index
    %c0_29 = arith.constant 0 : index
    %55 = vector.load %arg10[%c9, %c1_28, %c0_29] : memref<10x18x4xbf16, #tpu.memory_space<vmem>>, vector<1x16x4xbf16>
    tpu.vector_store %arg10[%c9, %c1_28, %c0_29], %54 {strides = array<i32>} : memref<10x18x4xbf16, #tpu.memory_space<vmem>>, vector<1x16x4xbf16>,
    %c0_30 = arith.constant 0 : index
    %c0_31 = arith.constant 0 : index
    %c0_32 = arith.constant 0 : index
    %56 = vector.load %arg10[%c0_30, %c0_31, %c0_32] : memref<10x18x4xbf16, #tpu.memory_space<vmem>>, vector<8x16x4xbf16>
    %c0_33 = arith.constant 0 : index
    %c1_34 = arith.constant 1 : index
    %c0_35 = arith.constant 0 : index
    %57 = vector.load %arg10[%c0_33, %c1_34, %c0_35] : memref<10x18x4xbf16, #tpu.memory_space<vmem>>, vector<8x16x4xbf16>
    %c0_36 = arith.constant 0 : index
    %c2 = arith.constant 2 : index
    %c0_37 = arith.constant 0 : index
    %58 = vector.load %arg10[%c0_36, %c2, %c0_37] : memref<10x18x4xbf16, #tpu.memory_space<vmem>>, vector<8x16x4xbf16>
    %c1_38 = arith.constant 1 : index
    %c0_39 = arith.constant 0 : index
    %c0_40 = arith.constant 0 : index
    %59 = vector.load %arg10[%c1_38, %c0_39, %c0_40] : memref<10x18x4xbf16, #tpu.memory_space<vmem>>, vector<8x16x4xbf16>
    %c1_41 = arith.constant 1 : index
    %c1_42 = arith.constant 1 : index
    %c0_43 = arith.constant 0 : index
    %60 = vector.load %arg10[%c1_41, %c1_42, %c0_43] : memref<10x18x4xbf16, #tpu.memory_space<vmem>>, vector<8x16x4xbf16>
    %c1_44 = arith.constant 1 : index
    %c2_45 = arith.constant 2 : index
    %c0_46 = arith.constant 0 : index
    %61 = vector.load %arg10[%c1_44, %c2_45, %c0_46] : memref<10x18x4xbf16, #tpu.memory_space<vmem>>, vector<8x16x4xbf16>
    %c2_47 = arith.constant 2 : index
    %c0_48 = arith.constant 0 : index
    %c0_49 = arith.constant 0 : index
    %62 = vector.load %arg10[%c2_47, %c0_48, %c0_49] : memref<10x18x4xbf16, #tpu.memory_space<vmem>>, vector<8x16x4xbf16>
    %c2_50 = arith.constant 2 : index
    %c1_51 = arith.constant 1 : index
    %c0_52 = arith.constant 0 : index
    %63 = vector.load %arg10[%c2_50, %c1_51, %c0_52] : memref<10x18x4xbf16, #tpu.memory_space<vmem>>, vector<8x16x4xbf16>
    %c2_53 = arith.constant 2 : index
    %c2_54 = arith.constant 2 : index
    %c0_55 = arith.constant 0 : index
    %64 = vector.load %arg10[%c2_53, %c2_54, %c0_55] : memref<10x18x4xbf16, #tpu.memory_space<vmem>>, vector<8x16x4xbf16>
    %65 = tpu.concatenate %56, %57, %58, %59, %60, %61, %62, %63, %64 in 2 : vector<8x16x4xbf16>, vector<8x16x4xbf16>, vector<8x16x4xbf16>, vector<8x16x4xbf16>, vector<8x16x4xbf16>, vector<8x16x4xbf16>, vector<8x16x4xbf16>, vector<8x16x4xbf16>, vector<8x16x4xbf16> -> vector<8x16x36xbf16>
    %66 = vector.shape_cast %65 : vector<8x16x36xbf16> to vector<128x36xbf16>
    %c0_56 = arith.constant 0 : index
    %c0_57 = arith.constant 0 : index
    %67 = vector.load %arg7[%c0_56, %c0_57] : memref<36x128xbf16, #tpu.memory_space<vmem>>, vector<36x128xbf16>
    %cst_58 = arith.constant dense<0.000000e+00> : vector<128x128xf32>
    %68 = tpu.matmul %66, %67, %cst_58 {dimension_numbers = #tpu.dot_dimension_numbers<[1], [0], [0], [1], [0, 0, 1, 1], [], []>} : vector<128x36xbf16>, vector<36x128xbf16>, vector<128x128xf32> -> vector<128x128xf32>
    %c0_59 = arith.constant 0 : index
    %c0_60 = arith.constant 0 : index
    %69 = vector.load %arg8[%c0_59, %c0_60] : memref<1x128xf32, #tpu.memory_space<vmem>>, vector<1x128xf32>
    %70 = vector.shape_cast %69 : vector<1x128xf32> to vector<128xf32>
    %71 = vector.shape_cast %70 : vector<128xf32> to vector<1x128xf32>
    %72 = vector.broadcast %71 : vector<1x128xf32> to vector<128x128xf32>
    %73 = arith.addf %68, %72 : vector<128x128xf32>
    %74 = vector.shape_cast %73 : vector<128x128xf32> to vector<8x16x128xf32>
    %c0_61 = arith.constant 0 : index
    %c0_62 = arith.constant 0 : index
    %c0_63 = arith.constant 0 : index
    %c0_64 = arith.constant 0 : index
    %75 = vector.load %arg9[%c0_61, %c0_62, %c0_63, %c0_64] : memref<1x8x16x128xf32, #tpu.memory_space<vmem>>, vector<1x8x16x128xf32>
    %76 = vector.shape_cast %75 : vector<1x8x16x128xf32> to vector<8x16x128xf32>
    %77 = vector.shape_cast %74 : vector<8x16x128xf32> to vector<1x8x16x128xf32>
    tpu.vector_store %arg9[%c0_61, %c0_62, %c0_63, %c0_64], %77 {strides = array<i32>} : memref<1x8x16x128xf32, #tpu.memory_space<vmem>>, vector<1x8x16x128xf32>,
    return
  }
  func.func @transform_0(%arg0: i32, %arg1: i32) -> (i32, i32, i32, i32) {
    %c0_i32 = arith.constant 0 : i32
    %c0_i32_0 = arith.constant 0 : i32
    %c0_i32_1 = arith.constant 0 : i32
    return %arg0, %arg1, %c0_i32, %c0_i32_0 : i32, i32, i32, i32
  }
  func.func @transform_1(%arg0: i32, %arg1: i32) -> (i32, i32, i32, i32) {
    %c8_i32 = arith.constant 8 : i32
    %0 = arith.muli %arg1, %c8_i32 : i32
    %c1_i32 = arith.constant 1 : i32
    %1 = arith.subi %0, %c1_i32 : i32
    %c0_i32 = arith.constant 0 : i32
    %2 = arith.maxsi %1, %c0_i32 : i32
    %c0_i32_0 = arith.constant 0 : i32
    %c0_i32_1 = arith.constant 0 : i32
    %c0_i32_2 = arith.constant 0 : i32
    return %arg0, %2, %c0_i32_0, %c0_i32_1 : i32, i32, i32, i32
  }
  func.func @transform_2(%arg0: i32, %arg1: i32) -> (i32, i32, i32, i32) {
    %c8_i32 = arith.constant 8 : i32
    %0 = arith.muli %arg1, %c8_i32 : i32
    %c8_i32_0 = arith.constant 8 : i32
    %1 = arith.addi %0, %c8_i32_0 : i32
    %c15_i32 = arith.constant 15 : i32
    %2 = arith.minsi %1, %c15_i32 : i32
    %c0_i32 = arith.constant 0 : i32
    %c0_i32_1 = arith.constant 0 : i32
    %c0_i32_2 = arith.constant 0 : i32
    return %arg0, %2, %c0_i32, %c0_i32_1 : i32, i32, i32, i32
  }
  func.func @transform_3(%arg0: i32, %arg1: i32) -> (i32, i32) {
    %c0_i32 = arith.constant 0 : i32
    %c0_i32_0 = arith.constant 0 : i32
    %c0_i32_1 = arith.constant 0 : i32
    return %c0_i32, %c0_i32_0 : i32, i32
  }
  func.func @transform_4(%arg0: i32, %arg1: i32) -> (i32, i32) {
    %c0_i32 = arith.constant 0 : i32
    %c0_i32_0 = arith.constant 0 : i32
    %c0_i32_1 = arith.constant 0 : i32
    return %c0_i32, %c0_i32_0 : i32, i32
  }
  func.func @transform_5(%arg0: i32, %arg1: i32) -> (i32, i32) {
    %c0_i32 = arith.constant 0 : i32
    %c0_i32_0 = arith.constant 0 : i32
    %c0_i32_1 = arith.constant 0 : i32
    return %c0_i32, %c0_i32_0 : i32, i32
  }
  func.func @transform_6(%arg0: i32, %arg1: i32) -> (i32, i32) {
    %c0_i32 = arith.constant 0 : i32
    %c0_i32_0 = arith.constant 0 : i32
    %c0_i32_1 = arith.constant 0 : i32
    return %c0_i32, %c0_i32_0 : i32, i32
  }
  func.func @transform_7(%arg0: i32, %arg1: i32) -> (i32, i32, i32, i32) {
    %c0_i32 = arith.constant 0 : i32
    %c0_i32_0 = arith.constant 0 : i32
    %c0_i32_1 = arith.constant 0 : i32
    return %arg0, %arg1, %c0_i32, %c0_i32_0 : i32, i32, i32, i32
  }
}

</mosaic_0001>

<llo_original>
// kernel: tpu_custom_call.1
$region0: #{tpu_custom_call.1}
  #allocation0 [shape = 'u32[]', space=smem, size = 0x4, offset = 0x4, fixed_abs, tag = 'smem constant byte address 0x4 - core index']
  #allocation1 [shape = 'u32[72,128]{1,0:T(1,128)}', space=vmem, size = 0x9000, scoped, tag = 'internal scratch']
  #allocation2 [shape = 'bf16[10,18,4]{2,1,0:T(8,128)(2,1)}', space=vmem, size = 0xf000, scoped, tag = 'scratch operand']
  %s0 = inlined_call_operand.vmem [shape: bf16[2,16,16,4], index: 0, kind: input, shape index: {}]
  %s1 = inlined_call_operand.vmem [shape: bf16[2,16,16,4], index: 1, kind: input, shape index: {}]
  %s2 = inlined_call_operand.vmem [shape: bf16[2,16,16,4], index: 2, kind: input, shape index: {}]
  %s3 = inlined_call_operand.vmem [shape: f32[1,4], index: 3, kind: input, shape index: {}]
  %s4 = inlined_call_operand.vmem [shape: f32[1,4], index: 4, kind: input, shape index: {}]
  %s5 = inlined_call_operand.vmem [shape: bf16[36,128], index: 5, kind: input, shape index: {}]
  %s6 = inlined_call_operand.vmem [shape: f32[1,128], index: 6, kind: input, shape index: {}]
  %s7 = inlined_call_operand.hbm [shape: f32[2,16,16,128], index: 7, kind: output, shape index: {}]
  %s8 = sld [smem:[#allocation0]]
  $region61: #{tpu_custom_call.1} parent=0
    _
  %s10 = ssub.s32 1, %s8
  %s11 = scalar_select 0, %s10, %s8
  $region1: #{tpu_custom_call.1} parent=0
    #allocation3 [shape = 'u8[131072]{0}', space=vmem, size = 0x20000, scoped, tag = 'output window, operand 0']
    #allocation4 [shape = 's32[2]{0}', space=sflag, size = 0x8, scoped, tag = 'scoped memory for tpu_custom_call.1']
    %12 = vsyncpa [#allocation4], 0
    %s13 = scalar_lea.sflag [#allocation4], 1
    %14 = vsyncpa %s13, 0
    loop: start=0, step=1, limit=6
    $region2: #{tpu_custom_call.1} parent=1 // loop_pre_header
      _
    $region3: #{tpu_custom_call.1} parent=1 // loop_header
      %s16 = sphi 0, %s20
      %p17 = scmp.ge.s32.totalorder %s16, 6
      %s23 = sphi 0, %s35
      %s24 = sphi 0, %s31
      %s25 = sphi 0, %s23
      %s26 = sphi 0, %s24
      %s27 = sphi 0, %s25
      %s28 = sphi 0, %s26
      %s40 = sphi 0, %s42
      %s43 = sphi 0, %s40
      %s44 = sphi 0, %s43
      %s60 = sphi 0, %s44
      %s76 = sphi 0, %s78
      %s79 = sphi 0, %s76
      %s80 = sphi 0, %s79
      %s96 = sphi 0, %s80
      %s112 = sphi 0, %s114
      %s115 = sphi 0, %s112
      %s116 = sphi 0, %s115
      %s132 = sphi 0, %s116
      %s136 = sphi 0, %s136
      %s138 = sphi 0, %s136
      %s139 = sphi 0, %s138
      %s153 = sphi 0, %s139
      %s157 = sphi 0, %s157
      %s159 = sphi 0, %s157
      %s160 = sphi 0, %s159
      %s174 = sphi 0, %s160
      %s178 = sphi 0, %s178
      %s180 = sphi 0, %s178
      %s181 = sphi 0, %s180
      %s195 = sphi 0, %s181
      %s199 = sphi 0, %s199
      %s201 = sphi 0, %s199
      %s202 = sphi 0, %s201
      %s216 = sphi 0, %s202
      %s224 = sphi 0, %s226
      %s227 = sphi 0, %s224
      %s228 = sphi 0, %s227
      %s244 = sphi 0, %s228
    $region4: #{tpu_custom_call.1} parent=1 // loop_header_branch
      %19 = sbr.rel (%p17) target = $region8
    $region5: #{tpu_custom_call.1} parent=1 // loop_body
      %s21 = ssub.s32 %s16, 1
      %s22 = ssub.s32 %s16, 2
      %s29 = sadd.s32 1, %s24
      %p30 = scmp.ge.s32.totalorder %s29, 2
      %s31 = scalar_select %p30, 0, %s29
      %s32 = sadd.s32 1, %s23
      %s33 = scalar_select %p30, %s32, %s23
      %p34 = scmp.ge.s32.totalorder %s33, 2
      %s35 = scalar_select %p34, 0, %s33
      %s36 = ssub.s32 %s23, %s35
      %s37 = ssub.s32 %s24, %s31
      %s38 = sor.u32 %s36, %s37
      %p39 = scmp.eq.s32.totalorder %s38, 0
      %s41 = sadd.s32 %s40, 1
      %s42 = scalar_select %p39, %s40, %s41
      %p45 = pneg %p39
      %p46 = scmp.eq.s32.totalorder %s16, 3
      %p47 = por %p45, %p46
      %p48 = scmp.ne.s32.totalorder %s40, %s43
      %p49 = scmp.eq.s32.totalorder %s16, 0
      %p50 = por %p48, %p49
      %p51 = scmp.ne.s32.totalorder %s40, %s43
      %p52 = scmp.eq.s32.totalorder %s21, 3
      %p53 = por %p51, %p52
      %p54 = scmp.ne.s32.totalorder %s43, %s44
      %p55 = scmp.eq.s32.totalorder %s21, 0
      %p56 = por %p54, %p55
      %p57 = scmp.ne.s32.totalorder %s43, %s44
      %p58 = scmp.eq.s32.totalorder %s22, 3
      %p59 = por %p57, %p58
      %p61 = scmp.ne.s32.totalorder %s44, %s60
      %p62 = scmp.eq.s32.totalorder %s22, 0
      %p63 = por %p61, %p62
      %s64 = smul.u32 %s24, 8
      %s65 = ssub.s32 %s64, 1
      %p66 = scmp.gt.s32.totalorder %s65, 0
      %s67 = scalar_select %p66, %s65, 0
      %s68 = smul.u32 %s31, 8
      %s69 = ssub.s32 %s68, 1
      %p70 = scmp.gt.s32.totalorder %s69, 0
      %s71 = scalar_select %p70, %s69, 0
      %s72 = ssub.s32 %s23, %s35
      %s73 = ssub.s32 %s67, %s71
      %s74 = sor.u32 %s72, %s73
      %p75 = scmp.eq.s32.totalorder %s74, 0
      %s77 = sadd.s32 %s76, 1
      %s78 = scalar_select %p75, %s76, %s77
      %p81 = pneg %p75
      %p82 = scmp.eq.s32.totalorder %s16, 3
      %p83 = por %p81, %p82
      %p84 = scmp.ne.s32.totalorder %s76, %s79
      %p85 = scmp.eq.s32.totalorder %s16, 0
      %p86 = por %p84, %p85
      %p87 = scmp.ne.s32.totalorder %s76, %s79
      %p88 = scmp.eq.s32.totalorder %s21, 3
      %p89 = por %p87, %p88
      %p90 = scmp.ne.s32.totalorder %s79, %s80
      %p91 = scmp.eq.s32.totalorder %s21, 0
      %p92 = por %p90, %p91
      %p93 = scmp.ne.s32.totalorder %s79, %s80
      %p94 = scmp.eq.s32.totalorder %s22, 3
      %p95 = por %p93, %p94
      %p97 = scmp.ne.s32.totalorder %s80, %s96
      %p98 = scmp.eq.s32.totalorder %s22, 0
      %p99 = por %p97, %p98
      %s100 = smul.u32 %s24, 8
      %s101 = sadd.s32 %s100, 8
      %p102 = scmp.lt.s32.totalorder %s101, 15
      %s103 = scalar_select %p102, %s101, 15
      %s104 = smul.u32 %s31, 8
      %s105 = sadd.s32 %s104, 8
      %p106 = scmp.lt.s32.totalorder %s105, 15
      %s107 = scalar_select %p106, %s105, 15
      %s108 = ssub.s32 %s23, %s35
      %s109 = ssub.s32 %s103, %s107
      %s110 = sor.u32 %s108, %s109
      %p111 = scmp.eq.s32.totalorder %s110, 0
      %s113 = sadd.s32 %s112, 1
      %s114 = scalar_select %p111, %s112, %s113
      %p117 = pneg %p111
      %p118 = scmp.eq.s32.totalorder %s16, 3
      %p119 = por %p117, %p118
      %p120 = scmp.ne.s32.totalorder %s112, %s115
      %p121 = scmp.eq.s32.totalorder %s16, 0
      %p122 = por %p120, %p121
      %p123 = scmp.ne.s32.totalorder %s112, %s115
      %p124 = scmp.eq.s32.totalorder %s21, 3
      %p125 = por %p123, %p124
      %p126 = scmp.ne.s32.totalorder %s115, %s116
      %p127 = scmp.eq.s32.totalorder %s21, 0
      %p128 = por %p126, %p127
      %p129 = scmp.ne.s32.totalorder %s115, %s116
      %p130 = scmp.eq.s32.totalorder %s22, 3
      %p131 = por %p129, %p130
      %p133 = scmp.ne.s32.totalorder %s116, %s132
      %p134 = scmp.eq.s32.totalorder %s22, 0
      %p135 = por %p133, %p134
      %s137 = sadd.s32 %s136, 1
      %p140 = scmp.eq.s32.totalorder %s16, 3
      %p141 = scmp.ne.s32.totalorder %s136, %s138
      %p142 = scmp.eq.s32.totalorder %s16, 0
      %p143 = por %p141, %p142
      %p144 = scmp.ne.s32.totalorder %s136, %s138
      %p145 = scmp.eq.s32.totalorder %s21, 3
      %p146 = por %p144, %p145
      %p147 = scmp.ne.s32.totalorder %s138, %s139
      %p148 = scmp.eq.s32.totalorder %s21, 0
      %p149 = por %p147, %p148
      %p150 = scmp.ne.s32.totalorder %s138, %s139
      %p151 = scmp.eq.s32.totalorder %s22, 3
      %p152 = por %p150, %p151
      %p154 = scmp.ne.s32.totalorder %s139, %s153
      %p155 = scmp.eq.s32.totalorder %s22, 0
      %p156 = por %p154, %p155
      %s158 = sadd.s32 %s157, 1
      %p161 = scmp.eq.s32.totalorder %s16, 3
      %p162 = scmp.ne.s32.totalorder %s157, %s159
      %p163 = scmp.eq.s32.totalorder %s16, 0
      %p164 = por %p162, %p163
      %p165 = scmp.ne.s32.totalorder %s157, %s159
      %p166 = scmp.eq.s32.totalorder %s21, 3
      %p167 = por %p165, %p166
      %p168 = scmp.ne.s32.totalorder %s159, %s160
      %p169 = scmp.eq.s32.totalorder %s21, 0
      %p170 = por %p168, %p169
      %p171 = scmp.ne.s32.totalorder %s159, %s160
      %p172 = scmp.eq.s32.totalorder %s22, 3
      %p173 = por %p171, %p172
      %p175 = scmp.ne.s32.totalorder %s160, %s174
      %p176 = scmp.eq.s32.totalorder %s22, 0
      %p177 = por %p175, %p176
      %s179 = sadd.s32 %s178, 1
      %p182 = scmp.eq.s32.totalorder %s16, 3
      %p183 = scmp.ne.s32.totalorder %s178, %s180
      %p184 = scmp.eq.s32.totalorder %s16, 0
      %p185 = por %p183, %p184
      %p186 = scmp.ne.s32.totalorder %s178, %s180
      %p187 = scmp.eq.s32.totalorder %s21, 3
      %p188 = por %p186, %p187
      %p189 = scmp.ne.s32.totalorder %s180, %s181
      %p190 = scmp.eq.s32.totalorder %s21, 0
      %p191 = por %p189, %p190
      %p192 = scmp.ne.s32.totalorder %s180, %s181
      %p193 = scmp.eq.s32.totalorder %s22, 3
      %p194 = por %p192, %p193
      %p196 = scmp.ne.s32.totalorder %s181, %s195
      %p197 = scmp.eq.s32.totalorder %s22, 0
      %p198 = por %p196, %p197
      %s200 = sadd.s32 %s199, 1
      %p203 = scmp.eq.s32.totalorder %s16, 3
      %p204 = scmp.ne.s32.totalorder %s199, %s201
      %p205 = scmp.eq.s32.totalorder %s16, 0
      %p206 = por %p204, %p205
      %p207 = scmp.ne.s32.totalorder %s199, %s201
      %p208 = scmp.eq.s32.totalorder %s21, 3
      %p209 = por %p207, %p208
      %p210 = scmp.ne.s32.totalorder %s201, %s202
      %p211 = scmp.eq.s32.totalorder %s21, 0
      %p212 = por %p210, %p211
      %p213 = scmp.ne.s32.totalorder %s201, %s202
      %p214 = scmp.eq.s32.totalorder %s22, 3
      %p215 = por %p213, %p214
      %p217 = scmp.ne.s32.totalorder %s202, %s216
      %p218 = scmp.eq.s32.totalorder %s22, 0
      %p219 = por %p217, %p218
      %s220 = ssub.s32 %s23, %s35
      %s221 = ssub.s32 %s24, %s31
      %s222 = sor.u32 %s220, %s221
      %p223 = scmp.eq.s32.totalorder %s222, 0
      %s225 = sadd.s32 %s224, 1
      %s226 = scalar_select %p223, %s224, %s225
      %p229 = pneg %p223
      %p230 = scmp.eq.s32.totalorder %s16, 3
      %p231 = por %p229, %p230
      %p232 = scmp.ne.s32.totalorder %s224, %s227
      %p233 = scmp.eq.s32.totalorder %s16, 0
      %p234 = por %p232, %p233
      %p235 = scmp.ne.s32.totalorder %s224, %s227
      %p236 = scmp.eq.s32.totalorder %s21, 3
      %p237 = por %p235, %p236
      %p238 = scmp.ne.s32.totalorder %s227, %s228
      %p239 = scmp.eq.s32.totalorder %s21, 0
      %p240 = por %p238, %p239
      %p241 = scmp.ne.s32.totalorder %s227, %s228
      %p242 = scmp.eq.s32.totalorder %s22, 3
      %p243 = por %p241, %p242
      %p245 = scmp.ne.s32.totalorder %s228, %s244
      %p246 = scmp.eq.s32.totalorder %s22, 0
      %p247 = por %p245, %p246
      %p248 = scmp.le.s32.totalorder 1, %s16
      %p249 = scmp.lt.s32.totalorder %s16, 5
      %p250 = pnand %p248, %p249
      %p251 = pneg %p250
      // Predicated region
      $region9: #{tpu_custom_call.1} parent=5 // pred_check
        _
      $region10: #{tpu_custom_call.1} parent=5 // pred_check_branch
        %253 = sbr.rel (%p250) target = $region12
      $region11: #{tpu_custom_call.1} parent=5 // pred_region
        %s254 = ssub.s32 %s16, 1
        // Predicated region
        $region13: #{tpu_custom_call.1} parent=11 // pred_check
          %p255 = pneg %p149
        $region14: #{tpu_custom_call.1} parent=11 // pred_check_branch
          %257 = sbr.rel (%p255) target = $region16
        $region15: #{tpu_custom_call.1} parent=11 // pred_region
          _
        $region16: #{tpu_custom_call.1} parent=11 // pred_fallthru
          _
        // Predicated region
        $region17: #{tpu_custom_call.1} parent=11 // pred_check
          %p258 = pneg %p170
        $region18: #{tpu_custom_call.1} parent=11 // pred_check_branch
          %260 = sbr.rel (%p258) target = $region20
        $region19: #{tpu_custom_call.1} parent=11 // pred_region
          _
        $region20: #{tpu_custom_call.1} parent=11 // pred_fallthru
          _
        // Predicated region
        $region21: #{tpu_custom_call.1} parent=11 // pred_check
          %p261 = pneg %p191
        $region22: #{tpu_custom_call.1} parent=11 // pred_check_branch
          %263 = sbr.rel (%p261) target = $region24
        $region23: #{tpu_custom_call.1} parent=11 // pred_region
          _
        $region24: #{tpu_custom_call.1} parent=11 // pred_fallthru
          _
        // Predicated region
        $region25: #{tpu_custom_call.1} parent=11 // pred_check
          %p264 = pneg %p212
        $region26: #{tpu_custom_call.1} parent=11 // pred_check_branch
          %266 = sbr.rel (%p264) target = $region28
        $region27: #{tpu_custom_call.1} parent=11 // pred_region
          _
        $region28: #{tpu_custom_call.1} parent=11 // pred_fallthru
          _
      $region12: #{tpu_custom_call.1} parent=5 // pred_fallthru
        _
      %p267 = scmp.lt.s32.totalorder %s16, 4
      // Predicated region
      $region29: #{tpu_custom_call.1} parent=5 // pred_check
        %p268 = pneg %p267
      $region30: #{tpu_custom_call.1} parent=5 // pred_check_branch
        %270 = sbr.rel (%p268) target = $region32
      $region31: #{tpu_custom_call.1} parent=5 // pred_region
        // Predicated region
        $region33: #{tpu_custom_call.1} parent=31 // pred_check
          %p271 = pneg %p50
        $region34: #{tpu_custom_call.1} parent=31 // pred_check_branch
          %273 = sbr.rel (%p271) target = $region36
        $region35: #{tpu_custom_call.1} parent=31 // pred_region
          %s274 = smul.u32 8, %s24
          %p275 = scmp.lt.s32.totalorder %s23, 1
          %s276 = scalar_select %p275, %s23, 1
          %p277 = scmp.lt.s32.totalorder %s274, 15
          %s278 = scalar_select %p277, %s274, 15
          %s279 = smul.addr %s278, 2
          %s280 = smul.addr %s276, 32
          %s281 = sadd.s32 %s279, %s280
          %s282 = smul.addr %s281, 4
          %s283 = scalar_lea.vmem %s0, %s282
          %s284 = smul.u32 8, %s24
        $region36: #{tpu_custom_call.1} parent=31 // pred_fallthru
          _
        // Predicated region
        $region37: #{tpu_custom_call.1} parent=31 // pred_check
          %p285 = pneg %p86
        $region38: #{tpu_custom_call.1} parent=31 // pred_check_branch
          %287 = sbr.rel (%p285) target = $region40
        $region39: #{tpu_custom_call.1} parent=31 // pred_region
          %s288 = smul.u32 %s24, 8
          %s289 = ssub.s32 %s288, 1
          %p290 = scmp.gt.s32.totalorder %s289, 0
          %s291 = scalar_select %p290, %s289, 0
          %p292 = scmp.lt.s32.totalorder %s23, 1
          %s293 = scalar_select %p292, %s23, 1
          %p294 = scmp.lt.s32.totalorder %s291, 15
          %s295 = scalar_select %p294, %s291, 15
          %s296 = smul.addr %s295, 2
          %s297 = smul.addr %s293, 32
          %s298 = sadd.s32 %s296, %s297
          %s299 = smul.addr %s298, 4
          %s300 = scalar_lea.vmem %s1, %s299
          %s301 = smul.u32 %s24, 8
          %s302 = ssub.s32 %s301, 1
          %p303 = scmp.gt.s32.totalorder %s302, 0
          %s304 = scalar_select %p303, %s302, 0
        $region40: #{tpu_custom_call.1} parent=31 // pred_fallthru
          _
        // Predicated region
        $region41: #{tpu_custom_call.1} parent=31 // pred_check
          %p305 = pneg %p122
        $region42: #{tpu_custom_call.1} parent=31 // pred_check_branch
          %307 = sbr.rel (%p305) target = $region44
        $region43: #{tpu_custom_call.1} parent=31 // pred_region
          %s308 = smul.u32 %s24, 8
          %s309 = sadd.s32 %s308, 8
          %p310 = scmp.lt.s32.totalorder %s309, 15
          %s311 = scalar_select %p310, %s309, 15
          %p312 = scmp.lt.s32.totalorder %s23, 1
          %s313 = scalar_select %p312, %s23, 1
          %p314 = scmp.lt.s32.totalorder %s311, 15
          %s315 = scalar_select %p314, %s311, 15
          %s316 = smul.addr %s315, 2
          %s317 = smul.addr %s313, 32
          %s318 = sadd.s32 %s316, %s317
          %s319 = smul.addr %s318, 4
          %s320 = scalar_lea.vmem %s2, %s319
          %s321 = smul.u32 %s24, 8
          %s322 = sadd.s32 %s321, 8
          %p323 = scmp.lt.s32.totalorder %s322, 15
          %s324 = scalar_select %p323, %s322, 15
        $region44: #{tpu_custom_call.1} parent=31 // pred_fallthru
          _
      $region32: #{tpu_custom_call.1} parent=5 // pred_fallthru
        _
      %p325 = scmp.le.s32.totalorder 1, %s16
      %p326 = scmp.lt.s32.totalorder %s16, 5
      %p327 = pnand %p325, %p326
      %p328 = pneg %p327
      // Predicated region
      $region45: #{tpu_custom_call.1} parent=5 // pred_check
        _
      $region46: #{tpu_custom_call.1} parent=5 // pred_check_branch
        %330 = sbr.rel (%p327) target = $region48
      $region47: #{tpu_custom_call.1} parent=5 // pred_region
        %s331 = ssub.s32 %s16, 1
        %s332 = smul.u32 8, %s26
        %p333 = scmp.lt.s32.totalorder %s25, 1
        %s334 = scalar_select %p333, %s25, 1
        %p335 = scmp.lt.s32.totalorder %s332, 15
        %s336 = scalar_select %p335, %s332, 15
        %s337 = smul.addr %s336, 2
        %s338 = smul.addr %s334, 32
        %s339 = sadd.s32 %s337, %s338
        %s340 = smul.addr %s339, 4
        %s341 = scalar_lea.vmem %s0, %s340
        %p342 = pneg %p56
        %p343 = pneg %p53
        %s344 = smul.u32 %s26, 8
        %s345 = ssub.s32 %s344, 1
        %p346 = scmp.gt.s32.totalorder %s345, 0
        %s347 = scalar_select %p346, %s345, 0
        %p348 = scmp.lt.s32.totalorder %s25, 1
        %s349 = scalar_select %p348, %s25, 1
        %p350 = scmp.lt.s32.totalorder %s347, 15
        %s351 = scalar_select %p350, %s347, 15
        %s352 = smul.addr %s351, 2
        %s353 = smul.addr %s349, 32
        %s354 = sadd.s32 %s352, %s353
        %s355 = smul.addr %s354, 4
        %s356 = scalar_lea.vmem %s1, %s355
        %p357 = pneg %p92
        %p358 = pneg %p89
        %s359 = smul.u32 %s26, 8
        %s360 = sadd.s32 %s359, 8
        %p361 = scmp.lt.s32.totalorder %s360, 15
        %s362 = scalar_select %p361, %s360, 15
        %p363 = scmp.lt.s32.totalorder %s25, 1
        %s364 = scalar_select %p363, %s25, 1
        %p365 = scmp.lt.s32.totalorder %s362, 15
        %s366 = scalar_select %p365, %s362, 15
        %s367 = smul.addr %s366, 2
        %s368 = smul.addr %s364, 32
        %s369 = sadd.s32 %s367, %s368
        %s370 = smul.addr %s369, 4
        %s371 = scalar_lea.vmem %s2, %s370
        %p372 = pneg %p128
        %p373 = pneg %p125
        %p374 = pneg %p149
        %p375 = pneg %p146
        %p376 = pneg %p170
        %p377 = pneg %p167
        %p378 = pneg %p191
        %p379 = pneg %p188
        %p380 = pneg %p212
        %p381 = pneg %p209
        %p382 = pneg %p240
        %p383 = pneg %p237
        %s384 = sand.u32 %s227, 1
        %s385 = scalar_lea.sflag [#allocation4], %s384
        %s386 = sand.u32 %s227, 1
        %s387 = smul.addr %s386, 128
        %s388 = scalar_lea.vmem [#allocation3], %s387
        %s389 = smul.u32 8, %s26
        %p390 = scmp.lt.s32.totalorder %s25, 1
        %s391 = scalar_select %p390, %s25, 1
        %p392 = scmp.lt.s32.totalorder %s389, 15
        %s393 = scalar_select %p392, %s389, 15
        %s394 = smul.addr %s393, 2
        %s395 = smul.addr %s391, 32
        %s396 = sadd.s32 %s394, %s395
        %s397 = smul.addr %s396, 4
        %s398 = scalar_lea.vmem %s0, %s397
        %s399 = smul.u32 8, %s26
        %s400 = smul.u32 %s26, 8
        %s401 = ssub.s32 %s400, 1
        %p402 = scmp.gt.s32.totalorder %s401, 0
        %s403 = scalar_select %p402, %s401, 0
        %p404 = scmp.lt.s32.totalorder %s25, 1
        %s405 = scalar_select %p404, %s25, 1
        %p406 = scmp.lt.s32.totalorder %s403, 15
        %s407 = scalar_select %p406, %s403, 15
        %s408 = smul.addr %s407, 2
        %s409 = smul.addr %s405, 32
        %s410 = sadd.s32 %s408, %s409
        %s411 = smul.addr %s410, 4
        %s412 = scalar_lea.vmem %s1, %s411
        %s413 = smul.u32 %s26, 8
        %s414 = ssub.s32 %s413, 1
        %p415 = scmp.gt.s32.totalorder %s414, 0
        %s416 = scalar_select %p415, %s414, 0
        %s417 = smul.u32 %s26, 8
        %s418 = sadd.s32 %s417, 8
        %p419 = scmp.lt.s32.totalorder %s418, 15
        %s420 = scalar_select %p419, %s418, 15
        %p421 = scmp.lt.s32.totalorder %s25, 1
        %s422 = scalar_select %p421, %s25, 1
        %p423 = scmp.lt.s32.totalorder %s420, 15
        %s424 = scalar_select %p423, %s420, 15
        %s425 = smul.addr %s424, 2
        %s426 = smul.addr %s422, 32
        %s427 = sadd.s32 %s425, %s426
        %s428 = smul.addr %s427, 4
        %s429 = scalar_lea.vmem %s2, %s428
        %s430 = smul.u32 %s26, 8
        %s431 = sadd.s32 %s430, 8
        %p432 = scmp.lt.s32.totalorder %s431, 15
        %s433 = scalar_select %p432, %s431, 15
        %s434 = smul.u32 8, %s26
        %v436 = vld [vmem:[%s3] sm:$0x1]
        %v437 = vld [vmem:[%s4] sm:$0x1]
        %vm438 = vcmask 24576
        %vm439 = vsmask.f32 256
        %vm440 = vmand %vm438, %vm439
        %v441 = vld [vmem:[#allocation2] sm:$0x1]
        %v442 = vsel %vm440, 0, %v441
        %443 = vst [vmem:[#allocation2] sm:$0x1] %v442
        %v444 = vld [vmem:[#allocation2 + $0xc] sm:$0x1]
        %v445 = vsel %vm440, 0, %v444
        %446 = vst [vmem:[#allocation2 + $0xc] sm:$0x1] %v445
        %v447 = vld [vmem:[#allocation2 + $0x18] sm:$0x1]
        %v448 = vsel %vm440, 0, %v447
        %449 = vst [vmem:[#allocation2 + $0x18] sm:$0x1] %v448
        %v450 = vld [vmem:[#allocation2 + $0x24] sm:$0x1]
        %v451 = vsel %vm440, 0, %v450
        %452 = vst [vmem:[#allocation2 + $0x24] sm:$0x1] %v451
        %v453 = vld [vmem:[#allocation2 + $0x30] sm:$0x1]
        %v454 = vsel %vm440, 0, %v453
        %455 = vst [vmem:[#allocation2 + $0x30] sm:$0x1] %v454
        %v456 = vld [vmem:[#allocation2 + $0x3c] sm:$0x1]
        %v457 = vsel %vm440, 0, %v456
        %458 = vst [vmem:[#allocation2 + $0x3c] sm:$0x1] %v457
        %v459 = vld [vmem:[#allocation2 + $0x48] sm:$0x1]
        %v460 = vsel %vm440, 0, %v459
        %461 = vst [vmem:[#allocation2 + $0x48] sm:$0x1] %v460
        %v462 = vld [vmem:[#allocation2 + $0x54] sm:$0x1]
        %v463 = vsel %vm440, 0, %v462
        %464 = vst [vmem:[#allocation2 + $0x54] sm:$0x1] %v463
        %v465 = vld [vmem:[#allocation2 + $0x60] sm:$0x1]
        %v466 = vsel %vm440, 0, %v465
        %467 = vst [vmem:[#allocation2 + $0x60] sm:$0x1] %v466
        %v468 = vld [vmem:[#allocation2 + $0x6c] sm:$0x1]
        %v469 = vsel %vm440, 0, %v468
        %470 = vst [vmem:[#allocation2 + $0x6c] sm:$0x1] %v469
        %vm471 = vsmask.f32 7938
        %vm472 = vmand %vm438, %vm471
        %v473 = vld [vmem:[#allocation2 + $0x8] sm:$0x1]
        %v474 = vsel %vm472, 0, %v473
        %475 = vst [vmem:[#allocation2 + $0x8] sm:$0x1] %v474
        %v476 = vld [vmem:[#allocation2 + $0x14] sm:$0x1]
        %v477 = vsel %vm472, 0, %v476
        %478 = vst [vmem:[#allocation2 + $0x14] sm:$0x1] %v477
        %v479 = vld [vmem:[#allocation2 + $0x20] sm:$0x1]
        %v480 = vsel %vm472, 0, %v479
        %481 = vst [vmem:[#allocation2 + $0x20] sm:$0x1] %v480
        %v482 = vld [vmem:[#allocation2 + $0x2c] sm:$0x1]
        %v483 = vsel %vm472, 0, %v482
        %484 = vst [vmem:[#allocation2 + $0x2c] sm:$0x1] %v483
        %v485 = vld [vmem:[#allocation2 + $0x38] sm:$0x1]
        %v486 = vsel %vm472, 0, %v485
        %487 = vst [vmem:[#allocation2 + $0x38] sm:$0x1] %v486
        %v488 = vld [vmem:[#allocation2 + $0x44] sm:$0x1]
        %v489 = vsel %vm472, 0, %v488
        %490 = vst [vmem:[#allocation2 + $0x44] sm:$0x1] %v489
        %v491 = vld [vmem:[#allocation2 + $0x50] sm:$0x1]
        %v492 = vsel %vm472, 0, %v491
        %493 = vst [vmem:[#allocation2 + $0x50] sm:$0x1] %v492
        %v494 = vld [vmem:[#allocation2 + $0x5c] sm:$0x1]
        %v495 = vsel %vm472, 0, %v494
        %496 = vst [vmem:[#allocation2 + $0x5c] sm:$0x1] %v495
        %v497 = vld [vmem:[#allocation2 + $0x68] sm:$0x1]
        %v498 = vsel %vm472, 0, %v497
        %499 = vst [vmem:[#allocation2 + $0x68] sm:$0x1] %v498
        %v500 = vld [vmem:[#allocation2 + $0x74] sm:$0x1]
        %v501 = vsel %vm472, 0, %v500
        %502 = vst [vmem:[#allocation2 + $0x74] sm:$0x1] %v501
        %v503 = vld [vmem:[%s398] sm:$0xf]
        %v504 = vld [vmem:[%s398 + $0x4] sm:$0xf]
        %v505 = vld [vmem:[%s398 + $0x8] sm:$0xf]
        %v506 = vld [vmem:[%s398 + $0xc] sm:$0xf]
        %v507 = vld [vmem:[%s398 + $0x10] sm:$0xf]
        %v508 = vld [vmem:[%s398 + $0x14] sm:$0xf]
        %v509 = vld [vmem:[%s398 + $0x18] sm:$0xf]
        %v510 = vld [vmem:[%s398 + $0x1c] sm:$0xf]
        %v511 = vld [vmem:[%s398 + $0x20] sm:$0xf]
        %v512 = vld [vmem:[%s398 + $0x24] sm:$0xf]
        %v513 = vld [vmem:[%s398 + $0x28] sm:$0xf]
        %v514 = vld [vmem:[%s398 + $0x2c] sm:$0xf]
        %v515 = vld [vmem:[%s398 + $0x30] sm:$0xf]
        %v516 = vld [vmem:[%s398 + $0x34] sm:$0xf]
        %v517 = vld [vmem:[%s398 + $0x38] sm:$0xf]
        %v518 = vld [vmem:[%s398 + $0x3c] sm:$0xf]
        %v519 = vunpack.c.l.bf16 %v503
        %v520 = vunpack.c.l.bf16 %v504
        %v521 = vunpack.c.l.bf16 %v505
        %v522 = vunpack.c.l.bf16 %v506
        %v523 = vunpack.c.l.bf16 %v507
        %v524 = vunpack.c.l.bf16 %v508
        %v525 = vunpack.c.l.bf16 %v509
        %v526 = vunpack.c.l.bf16 %v510
        %v527 = vunpack.c.l.bf16 %v511
        %v528 = vunpack.c.l.bf16 %v512
        %v529 = vunpack.c.l.bf16 %v513
        %v530 = vunpack.c.l.bf16 %v514
        %v531 = vunpack.c.l.bf16 %v515
        %v532 = vunpack.c.l.bf16 %v516
        %v533 = vunpack.c.l.bf16 %v517
        %v534 = vunpack.c.l.bf16 %v518
        %v536 = vperm.slane %v436, 0
        %v538 = vmul.f32 %v519, %v536
        %v539 = vmul.f32 %v520, %v536
        %v540 = vmul.f32 %v521, %v536
        %v541 = vmul.f32 %v522, %v536
        %v542 = vmul.f32 %v523, %v536
        %v543 = vmul.f32 %v524, %v536
        %v544 = vmul.f32 %v525, %v536
        %v545 = vmul.f32 %v526, %v536
        %v546 = vmul.f32 %v527, %v536
        %v547 = vmul.f32 %v528, %v536
        %v548 = vmul.f32 %v529, %v536
        %v549 = vmul.f32 %v530, %v536
        %v550 = vmul.f32 %v531, %v536
        %v551 = vmul.f32 %v532, %v536
        %v552 = vmul.f32 %v533, %v536
        %v553 = vmul.f32 %v534, %v536
        %v555 = vperm.slane %v437, 0
        %v557 = vadd.f32 %v538, %v555
        %v558 = vadd.f32 %v539, %v555
        %v559 = vadd.f32 %v540, %v555
        %v560 = vadd.f32 %v541, %v555
        %v561 = vadd.f32 %v542, %v555
        %v562 = vadd.f32 %v543, %v555
        %v563 = vadd.f32 %v544, %v555
        %v564 = vadd.f32 %v545, %v555
        %v565 = vadd.f32 %v546, %v555
        %v566 = vadd.f32 %v547, %v555
        %v567 = vadd.f32 %v548, %v555
        %v568 = vadd.f32 %v549, %v555
        %v569 = vadd.f32 %v550, %v555
        %v570 = vadd.f32 %v551, %v555
        %v571 = vadd.f32 %v552, %v555
        %v572 = vadd.f32 %v553, %v555
        %v573 = vmax.f32 %v557, 0.0
        %v574 = vmax.f32 %v558, 0.0
        %v575 = vmax.f32 %v559, 0.0
        %v576 = vmax.f32 %v560, 0.0
        %v577 = vmax.f32 %v561, 0.0
        %v578 = vmax.f32 %v562, 0.0
        %v579 = vmax.f32 %v563, 0.0
        %v580 = vmax.f32 %v564, 0.0
        %v581 = vmax.f32 %v565, 0.0
        %v582 = vmax.f32 %v566, 0.0
        %v583 = vmax.f32 %v567, 0.0
        %v584 = vmax.f32 %v568, 0.0
        %v585 = vmax.f32 %v569, 0.0
        %v586 = vmax.f32 %v570, 0.0
        %v587 = vmax.f32 %v571, 0.0
        %v588 = vmax.f32 %v572, 0.0
        %v589 = vpack.c.bf16 %v573, %v573
        %v590 = vpack.c.bf16 %v574, %v574
        %v591 = vpack.c.bf16 %v575, %v575
        %v592 = vpack.c.bf16 %v576, %v576
        %v593 = vpack.c.bf16 %v577, %v577
        %v594 = vpack.c.bf16 %v578, %v578
        %v595 = vpack.c.bf16 %v579, %v579
        %v596 = vpack.c.bf16 %v580, %v580
        %v597 = vpack.c.bf16 %v581, %v581
        %v598 = vpack.c.bf16 %v582, %v582
        %v599 = vpack.c.bf16 %v583, %v583
        %v600 = vpack.c.bf16 %v584, %v584
        %v601 = vpack.c.bf16 %v585, %v585
        %v602 = vpack.c.bf16 %v586, %v586
        %v603 = vpack.c.bf16 %v587, %v587
        %v604 = vpack.c.bf16 %v588, %v588
        %vm605 = vsmask.f32 4368
        %vm606 = vmor %vm439, %vm605
        %v608 = vshrl.u32 %v589, 16
        %v610 = vrot.slane %v608, 7
        %v611 = vshll.u32 %v589, 16
        %v613 = vor.u32 %v610, %v611
        %v614 = vrot.slane %v610, 4
        %v616 = vshrl.u32 %v590, 16
        %v618 = vrot.slane %v616, 7
        %v619 = vshll.u32 %v590, 16
        %v621 = vor.u32 %v618, %v619
        %v622 = vsel %vm606, %v614, %v621
        %v623 = vrot.slane %v618, 4
        %v625 = vshrl.u32 %v591, 16
        %v627 = vrot.slane %v625, 7
        %v628 = vshll.u32 %v591, 16
        %v630 = vor.u32 %v627, %v628
        %v631 = vrot.slane %v627, 4
        %v633 = vshrl.u32 %v592, 16
        %v635 = vrot.slane %v633, 7
        %v636 = vshll.u32 %v592, 16
        %v638 = vor.u32 %v635, %v636
        %v639 = vsel %vm606, %v631, %v638
        %v640 = vrot.slane %v635, 4
        %v642 = vshrl.u32 %v593, 16
        %v644 = vrot.slane %v642, 7
        %v645 = vshll.u32 %v593, 16
        %v647 = vor.u32 %v644, %v645
        %v648 = vrot.slane %v644, 4
        %v650 = vshrl.u32 %v594, 16
        %v652 = vrot.slane %v650, 7
        %v653 = vshll.u32 %v594, 16
        %v655 = vor.u32 %v652, %v653
        %v656 = vsel %vm606, %v648, %v655
        %v657 = vrot.slane %v652, 4
        %v659 = vshrl.u32 %v595, 16
        %v661 = vrot.slane %v659, 7
        %v662 = vshll.u32 %v595, 16
        %v664 = vor.u32 %v661, %v662
        %v665 = vrot.slane %v661, 4
        %v667 = vshrl.u32 %v596, 16
        %v669 = vrot.slane %v667, 7
        %v670 = vshll.u32 %v596, 16
        %v672 = vor.u32 %v669, %v670
        %v673 = vsel %vm606, %v665, %v672
        %v674 = vrot.slane %v669, 4
        %v676 = vshrl.u32 %v597, 16
        %v678 = vrot.slane %v676, 7
        %v679 = vshll.u32 %v597, 16
        %v681 = vor.u32 %v678, %v679
        %v682 = vrot.slane %v678, 4
        %v684 = vshrl.u32 %v598, 16
        %v686 = vrot.slane %v684, 7
        %v687 = vshll.u32 %v598, 16
        %v689 = vor.u32 %v686, %v687
        %v690 = vsel %vm606, %v682, %v689
        %v691 = vrot.slane %v686, 4
        %v693 = vshrl.u32 %v599, 16
        %v695 = vrot.slane %v693, 7
        %v696 = vshll.u32 %v599, 16
        %v698 = vor.u32 %v695, %v696
        %v699 = vrot.slane %v695, 4
        %v701 = vshrl.u32 %v600, 16
        %v703 = vrot.slane %v701, 7
        %v704 = vshll.u32 %v600, 16
        %v706 = vor.u32 %v703, %v704
        %v707 = vsel %vm606, %v699, %v706
        %v708 = vrot.slane %v703, 4
        %v710 = vshrl.u32 %v601, 16
        %v712 = vrot.slane %v710, 7
        %v713 = vshll.u32 %v601, 16
        %v715 = vor.u32 %v712, %v713
        %v716 = vrot.slane %v712, 4
        %v718 = vshrl.u32 %v602, 16
        %v720 = vrot.slane %v718, 7
        %v721 = vshll.u32 %v602, 16
        %v723 = vor.u32 %v720, %v721
        %v724 = vsel %vm606, %v716, %v723
        %v725 = vrot.slane %v720, 4
        %v727 = vshrl.u32 %v603, 16
        %v729 = vrot.slane %v727, 7
        %v730 = vshll.u32 %v603, 16
        %v732 = vor.u32 %v729, %v730
        %v733 = vrot.slane %v729, 4
        %v735 = vshrl.u32 %v604, 16
        %v737 = vrot.slane %v735, 7
        %v738 = vshll.u32 %v604, 16
        %v740 = vor.u32 %v737, %v738
        %v741 = vsel %vm606, %v733, %v740
        %v742 = vrot.slane %v737, 4
        %s767 = scalar_lea.vmem [#allocation2], 12
        %vm768 = vcmask 27648
        %vm769 = vmand %vm768, %vm471
        %v770 = vld [vmem:[%s767] sm:$0xf]
        %v771 = vsel %vm769, %v613, %v770
        %772 = vst [vmem:[%s767] sm:$0xf] %v771
        %vm773 = vcmask 27648
        %774 = vst.msk [vmem:[%s767 + $0x4] sm:$0xf] %vm773, %v622
        %v775 = vld [vmem:[%s767 + $0x8] sm:$0x1]
        %v776 = vsel %vm440, %v623, %v775
        %777 = vst [vmem:[%s767 + $0x8] sm:$0x1] %v776
        %v778 = vld [vmem:[%s767 + $0xc] sm:$0xf]
        %v779 = vsel %vm769, %v630, %v778
        %780 = vst [vmem:[%s767 + $0xc] sm:$0xf] %v779
        %781 = vst.msk [vmem:[%s767 + $0x10] sm:$0xf] %vm773, %v639
        %v782 = vld [vmem:[%s767 + $0x14] sm:$0x1]
        %v783 = vsel %vm440, %v640, %v782
        %784 = vst [vmem:[%s767 + $0x14] sm:$0x1] %v783
        %v785 = vld [vmem:[%s767 + $0x18] sm:$0xf]
        %v786 = vsel %vm769, %v647, %v785
        %787 = vst [vmem:[%s767 + $0x18] sm:$0xf] %v786
        %788 = vst.msk [vmem:[%s767 + $0x1c] sm:$0xf] %vm773, %v656
        %v789 = vld [vmem:[%s767 + $0x20] sm:$0x1]
        %v790 = vsel %vm440, %v657, %v789
        %791 = vst [vmem:[%s767 + $0x20] sm:$0x1] %v790
        %v792 = vld [vmem:[%s767 + $0x24] sm:$0xf]
        %v793 = vsel %vm769, %v664, %v792
        %794 = vst [vmem:[%s767 + $0x24] sm:$0xf] %v793
        %795 = vst.msk [vmem:[%s767 + $0x28] sm:$0xf] %vm773, %v673
        %v796 = vld [vmem:[%s767 + $0x2c] sm:$0x1]
        %v797 = vsel %vm440, %v674, %v796
        %798 = vst [vmem:[%s767 + $0x2c] sm:$0x1] %v797
        %v799 = vld [vmem:[%s767 + $0x30] sm:$0xf]
        %v800 = vsel %vm769, %v681, %v799
        %801 = vst [vmem:[%s767 + $0x30] sm:$0xf] %v800
        %802 = vst.msk [vmem:[%s767 + $0x34] sm:$0xf] %vm773, %v690
        %v803 = vld [vmem:[%s767 + $0x38] sm:$0x1]
        %v804 = vsel %vm440, %v691, %v803
        %805 = vst [vmem:[%s767 + $0x38] sm:$0x1] %v804
        %v806 = vld [vmem:[%s767 + $0x3c] sm:$0xf]
        %v807 = vsel %vm769, %v698, %v806
        %808 = vst [vmem:[%s767 + $0x3c] sm:$0xf] %v807
        %809 = vst.msk [vmem:[%s767 + $0x40] sm:$0xf] %vm773, %v707
        %v810 = vld [vmem:[%s767 + $0x44] sm:$0x1]
        %v811 = vsel %vm440, %v708, %v810
        %812 = vst [vmem:[%s767 + $0x44] sm:$0x1] %v811
        %v813 = vld [vmem:[%s767 + $0x48] sm:$0xf]
        %v814 = vsel %vm769, %v715, %v813
        %815 = vst [vmem:[%s767 + $0x48] sm:$0xf] %v814
        %816 = vst.msk [vmem:[%s767 + $0x4c] sm:$0xf] %vm773, %v724
        %v817 = vld [vmem:[%s767 + $0x50] sm:$0x1]
        %v818 = vsel %vm440, %v725, %v817
        %819 = vst [vmem:[%s767 + $0x50] sm:$0x1] %v818
        %v820 = vld [vmem:[%s767 + $0x54] sm:$0xf]
        %v821 = vsel %vm769, %v732, %v820
        %822 = vst [vmem:[%s767 + $0x54] sm:$0xf] %v821
        %823 = vst.msk [vmem:[%s767 + $0x58] sm:$0xf] %vm773, %v741
        %v824 = vld [vmem:[%s767 + $0x5c] sm:$0x1]
        %v825 = vsel %vm440, %v742, %v824
        %826 = vst [vmem:[%s767 + $0x5c] sm:$0x1] %v825
        %p827 = scmp.gt.s32.totalorder %s26, 0
        %s828 = scalar_select %p827, 1, 0
        %s829 = scvt.s32.f32 %s828
        %p831 = scmp.ne.f32.partialorder %s829, %s829
        %s832 = sshrl.u32 %s829, 16
        %s833 = sand.u32 %s832, 1
        %s834 = sadd.s32 32767, %s833
        %s835 = sadd.s32 %s829, %s834
        %s836 = sand.u32 %s835, 4294901760
        %s837 = scalar_select %p831, 2143289344, %s836
        %s839 = sshrl.u32 %s837, 16
        %p840 = scmp.lt.s32.totalorder %s26, 1
        %s841 = scalar_select %p840, 1, 0
        %s842 = scvt.s32.f32 %s841
        %p844 = scmp.ne.f32.partialorder %s842, %s842
        %s845 = sshrl.u32 %s842, 16
        %s846 = sand.u32 %s845, 1
        %s847 = sadd.s32 32767, %s846
        %s848 = sadd.s32 %s842, %s847
        %s849 = sand.u32 %s848, 4294901760
        %s850 = scalar_select %p844, 2143289344, %s849
        %s852 = sshrl.u32 %s850, 16
        %v853 = vld [vmem:[%s412] sm:$0xf]
        %v854 = vld [vmem:[%s412 + $0x4] sm:$0xf]
        %v855 = vunpack.c.l.bf16 %v853
        %v856 = vunpack.c.l.bf16 %v854
        %v857 = vmul.f32 %v855, %v536
        %v858 = vmul.f32 %v856, %v536
        %v859 = vadd.f32 %v857, %v555
        %v860 = vadd.f32 %v858, %v555
        %v861 = vmax.f32 %v859, 0.0
        %v862 = vmax.f32 %v860, 0.0
        %v863 = vpack.c.bf16 %v861, %v861
        %v864 = vpack.c.bf16 %v862, %v862
        %s865 = sshll.u32 %s839, 16
        %s866 = sor.u32 %s839, %s865
        %v867 = vstv %s866
        %v869 = vunpack.c.l.bf16 %v863
        %v870 = vunpack.c.l.bf16 %v864
        %v871 = vunpack.c.l.bf16 %v867
        %v872 = vmul.f32 %v869, %v871
        %v873 = vmul.f32 %v870, %v871
        %v874 = vpack.c.bf16 %v872, %v872
        %v875 = vpack.c.bf16 %v873, %v873
        %v877 = vshrl.u32 %v874, 16
        %v879 = vrot.slane %v877, 7
        %v880 = vshll.u32 %v874, 16
        %v882 = vor.u32 %v879, %v880
        %v883 = vrot.slane %v879, 4
        %v885 = vshrl.u32 %v875, 16
        %v887 = vrot.slane %v885, 7
        %v888 = vshll.u32 %v875, 16
        %v890 = vor.u32 %v887, %v888
        %v891 = vsel %vm606, %v883, %v890
        %v892 = vrot.slane %v887, 4
        %v896 = vld [vmem:[#allocation2] sm:$0xf]
        %v897 = vsel %vm769, %v882, %v896
        %898 = vst [vmem:[#allocation2] sm:$0xf] %v897
        %899 = vst.msk [vmem:[#allocation2 + $0x4] sm:$0xf] %vm773, %v891
        %v900 = vld [vmem:[#allocation2 + $0x8] sm:$0x1]
        %v901 = vsel %vm440, %v892, %v900
        %902 = vst [vmem:[#allocation2 + $0x8] sm:$0x1] %v901
        %v903 = vld [vmem:[%s429] sm:$0xf]
        %v904 = vld [vmem:[%s429 + $0x4] sm:$0xf]
        %v905 = vunpack.c.l.bf16 %v903
        %v906 = vunpack.c.l.bf16 %v904
        %v907 = vmul.f32 %v905, %v536
        %v908 = vmul.f32 %v906, %v536
        %v909 = vadd.f32 %v907, %v555
        %v910 = vadd.f32 %v908, %v555
        %v911 = vmax.f32 %v909, 0.0
        %v912 = vmax.f32 %v910, 0.0
        %v913 = vpack.c.bf16 %v911, %v911
        %v914 = vpack.c.bf16 %v912, %v912
        %s915 = sshll.u32 %s852, 16
        %s916 = sor.u32 %s852, %s915
        %v917 = vstv %s916
        %v919 = vunpack.c.l.bf16 %v913
        %v920 = vunpack.c.l.bf16 %v914
        %v921 = vunpack.c.l.bf16 %v917
        %v922 = vmul.f32 %v919, %v921
        %v923 = vmul.f32 %v920, %v921
        %v924 = vpack.c.bf16 %v922, %v922
        %v925 = vpack.c.bf16 %v923, %v923
        %v927 = vshrl.u32 %v924, 16
        %v929 = vrot.slane %v927, 7
        %v930 = vshll.u32 %v924, 16
        %v932 = vor.u32 %v929, %v930
        %v933 = vrot.slane %v929, 4
        %v935 = vshrl.u32 %v925, 16
        %v937 = vrot.slane %v935, 7
        %v938 = vshll.u32 %v925, 16
        %v940 = vor.u32 %v937, %v938
        %v941 = vsel %vm606, %v933, %v940
        %v942 = vrot.slane %v937, 4
        %s946 = scalar_lea.vmem [#allocation2], 108
        %v947 = vld [vmem:[%s946] sm:$0xf]
        %v948 = vsel %vm769, %v932, %v947
        %949 = vst [vmem:[%s946] sm:$0xf] %v948
        %950 = vst.msk [vmem:[%s946 + $0x4] sm:$0xf] %vm773, %v941
        %v951 = vld [vmem:[%s946 + $0x8] sm:$0x1]
        %v952 = vsel %vm440, %v942, %v951
        %953 = vst [vmem:[%s946 + $0x8] sm:$0x1] %v952
        %v954 = vld [vmem:[#allocation2] sm:$0xf]
        %v955 = vld [vmem:[#allocation2 + $0x4] sm:$0xf]
        %v956 = vld [vmem:[#allocation2 + $0xc] sm:$0xf]
        %v957 = vld [vmem:[#allocation2 + $0x10] sm:$0xf]
        %v958 = vld [vmem:[#allocation2 + $0x18] sm:$0xf]
        %v959 = vld [vmem:[#allocation2 + $0x1c] sm:$0xf]
        %v960 = vld [vmem:[#allocation2 + $0x24] sm:$0xf]
        %v961 = vld [vmem:[#allocation2 + $0x28] sm:$0xf]
        %v962 = vld [vmem:[#allocation2 + $0x30] sm:$0xf]
        %v963 = vld [vmem:[#allocation2 + $0x34] sm:$0xf]
        %v964 = vld [vmem:[#allocation2 + $0x3c] sm:$0xf]
        %v965 = vld [vmem:[#allocation2 + $0x40] sm:$0xf]
        %v966 = vld [vmem:[#allocation2 + $0x48] sm:$0xf]
        %v967 = vld [vmem:[#allocation2 + $0x4c] sm:$0xf]
        %v968 = vld [vmem:[#allocation2 + $0x54] sm:$0xf]
        %v969 = vld [vmem:[#allocation2 + $0x58] sm:$0xf]
        %v970 = vld [vmem:[#allocation2 + $0x8] sm:$0x1]
        %v971 = vld [vmem:[#allocation2 + $0x14] sm:$0x1]
        %v972 = vld [vmem:[#allocation2 + $0x20] sm:$0x1]
        %v973 = vld [vmem:[#allocation2 + $0x2c] sm:$0x1]
        %v974 = vld [vmem:[#allocation2 + $0x38] sm:$0x1]
        %v975 = vld [vmem:[#allocation2 + $0x44] sm:$0x1]
        %v976 = vld [vmem:[#allocation2 + $0x50] sm:$0x1]
        %v977 = vld [vmem:[#allocation2 + $0x5c] sm:$0x1]
        %v978 = vld [vmem:[#allocation2] sm:$0xe]
        %v979 = vld [vmem:[#allocation2 + $0xc] sm:$0xe]
        %v980 = vld [vmem:[#allocation2 + $0x18] sm:$0xe]
        %v981 = vld [vmem:[#allocation2 + $0x24] sm:$0xe]
        %v982 = vld [vmem:[#allocation2 + $0x30] sm:$0xe]
        %v983 = vld [vmem:[#allocation2 + $0x3c] sm:$0xe]
        %v984 = vld [vmem:[#allocation2 + $0x48] sm:$0xe]
        %v985 = vld [vmem:[#allocation2 + $0x54] sm:$0xe]
        %v986 = vld [vmem:[%s767] sm:$0xf]
        %v987 = vld [vmem:[%s767 + $0x4] sm:$0xf]
        %v988 = vld [vmem:[%s767 + $0xc] sm:$0xf]
        %v989 = vld [vmem:[%s767 + $0x10] sm:$0xf]
        %v990 = vld [vmem:[%s767 + $0x18] sm:$0xf]
        %v991 = vld [vmem:[%s767 + $0x1c] sm:$0xf]
        %v992 = vld [vmem:[%s767 + $0x24] sm:$0xf]
        %v993 = vld [vmem:[%s767 + $0x28] sm:$0xf]
        %v994 = vld [vmem:[%s767 + $0x30] sm:$0xf]
        %v995 = vld [vmem:[%s767 + $0x34] sm:$0xf]
        %v996 = vld [vmem:[%s767 + $0x3c] sm:$0xf]
        %v997 = vld [vmem:[%s767 + $0x40] sm:$0xf]
        %v998 = vld [vmem:[%s767 + $0x48] sm:$0xf]
        %v999 = vld [vmem:[%s767 + $0x4c] sm:$0xf]
        %v1000 = vld [vmem:[%s767 + $0x54] sm:$0xf]
        %v1001 = vld [vmem:[%s767 + $0x58] sm:$0xf]
        %v1002 = vld [vmem:[%s767 + $0x8] sm:$0x1]
        %v1003 = vld [vmem:[%s767 + $0x14] sm:$0x1]
        %v1004 = vld [vmem:[%s767 + $0x20] sm:$0x1]
        %v1005 = vld [vmem:[%s767 + $0x2c] sm:$0x1]
        %v1006 = vld [vmem:[%s767 + $0x38] sm:$0x1]
        %v1007 = vld [vmem:[%s767 + $0x44] sm:$0x1]
        %v1008 = vld [vmem:[%s767 + $0x50] sm:$0x1]
        %v1009 = vld [vmem:[%s767 + $0x5c] sm:$0x1]
        %v1010 = vld [vmem:[%s767] sm:$0xe]
        %v1011 = vld [vmem:[%s767 + $0xc] sm:$0xe]
        %v1012 = vld [vmem:[%s767 + $0x18] sm:$0xe]
        %v1013 = vld [vmem:[%s767 + $0x24] sm:$0xe]
        %v1014 = vld [vmem:[%s767 + $0x30] sm:$0xe]
        %v1015 = vld [vmem:[%s767 + $0x3c] sm:$0xe]
        %v1016 = vld [vmem:[%s767 + $0x48] sm:$0xe]
        %v1017 = vld [vmem:[%s767 + $0x54] sm:$0xe]
        %s1018 = scalar_lea.vmem [#allocation2], 24
        %v1019 = vld [vmem:[%s1018] sm:$0xf]
        %v1020 = vld [vmem:[%s1018 + $0x4] sm:$0xf]
        %v1021 = vld [vmem:[%s1018 + $0xc] sm:$0xf]
        %v1022 = vld [vmem:[%s1018 + $0x10] sm:$0xf]
        %v1023 = vld [vmem:[%s1018 + $0x18] sm:$0xf]
        %v1024 = vld [vmem:[%s1018 + $0x1c] sm:$0xf]
        %v1025 = vld [vmem:[%s1018 + $0x24] sm:$0xf]
        %v1026 = vld [vmem:[%s1018 + $0x28] sm:$0xf]
        %v1027 = vld [vmem:[%s1018 + $0x30] sm:$0xf]
        %v1028 = vld [vmem:[%s1018 + $0x34] sm:$0xf]
        %v1029 = vld [vmem:[%s1018 + $0x3c] sm:$0xf]
        %v1030 = vld [vmem:[%s1018 + $0x40] sm:$0xf]
        %v1031 = vld [vmem:[%s1018 + $0x48] sm:$0xf]
        %v1032 = vld [vmem:[%s1018 + $0x4c] sm:$0xf]
        %v1033 = vld [vmem:[%s1018 + $0x54] sm:$0xf]
        %v1034 = vld [vmem:[%s1018 + $0x58] sm:$0xf]
        %v1035 = vld [vmem:[%s1018 + $0x8] sm:$0x1]
        %v1036 = vld [vmem:[%s1018 + $0x14] sm:$0x1]
        %v1037 = vld [vmem:[%s1018 + $0x20] sm:$0x1]
        %v1038 = vld [vmem:[%s1018 + $0x2c] sm:$0x1]
        %v1039 = vld [vmem:[%s1018 + $0x38] sm:$0x1]
        %v1040 = vld [vmem:[%s1018 + $0x44] sm:$0x1]
        %v1041 = vld [vmem:[%s1018 + $0x50] sm:$0x1]
        %v1042 = vld [vmem:[%s1018 + $0x5c] sm:$0x1]
        %v1043 = vld [vmem:[%s1018] sm:$0xe]
        %v1044 = vld [vmem:[%s1018 + $0xc] sm:$0xe]
        %v1045 = vld [vmem:[%s1018 + $0x18] sm:$0xe]
        %v1046 = vld [vmem:[%s1018 + $0x24] sm:$0xe]
        %v1047 = vld [vmem:[%s1018 + $0x30] sm:$0xe]
        %v1048 = vld [vmem:[%s1018 + $0x3c] sm:$0xe]
        %v1049 = vld [vmem:[%s1018 + $0x48] sm:$0xe]
        %v1050 = vld [vmem:[%s1018 + $0x54] sm:$0xe]
        %v1067 = vunpack.c.l.b16 %v954
        %v1068 = vunpack.c.l.b16 %v955
        %v1069 = vunpack.c.l.b16 %v956
        %v1070 = vunpack.c.l.b16 %v957
        %v1071 = vunpack.c.l.b16 %v958
        %v1072 = vunpack.c.l.b16 %v959
        %v1073 = vunpack.c.l.b16 %v960
        %v1074 = vunpack.c.l.b16 %v961
        %v1075 = vunpack.c.l.b16 %v962
        %v1076 = vunpack.c.l.b16 %v963
        %v1077 = vunpack.c.l.b16 %v964
        %v1078 = vunpack.c.l.b16 %v965
        %v1079 = vunpack.c.l.b16 %v966
        %v1080 = vunpack.c.l.b16 %v967
        %v1081 = vunpack.c.l.b16 %v968
        %v1082 = vunpack.c.l.b16 %v969
        %v1083 = vpack.c.b16 %v1068, %v1067
        %v1084 = vpack.c.b16 %v1070, %v1069
        %v1085 = vpack.c.b16 %v1072, %v1071
        %v1086 = vpack.c.b16 %v1074, %v1073
        %v1087 = vpack.c.b16 %v1076, %v1075
        %v1088 = vpack.c.b16 %v1078, %v1077
        %v1089 = vpack.c.b16 %v1080, %v1079
        %v1090 = vpack.c.b16 %v1082, %v1081
        %v1099 = vunpack.c.l.b16 %v970
        %v1100 = vunpack.c.l.b16 %v971
        %v1101 = vunpack.c.l.b16 %v972
        %v1102 = vunpack.c.l.b16 %v973
        %v1103 = vunpack.c.l.b16 %v974
        %v1104 = vunpack.c.l.b16 %v975
        %v1105 = vunpack.c.l.b16 %v976
        %v1106 = vunpack.c.l.b16 %v977
        %v1107 = vpack.c.b16 %v1099, %v1099
        %v1108 = vpack.c.b16 %v1100, %v1100
        %v1109 = vpack.c.b16 %v1101, %v1101
        %v1110 = vpack.c.b16 %v1102, %v1102
        %v1111 = vpack.c.b16 %v1103, %v1103
        %v1112 = vpack.c.b16 %v1104, %v1104
        %v1113 = vpack.c.b16 %v1105, %v1105
        %v1114 = vpack.c.b16 %v1106, %v1106
        %vm1115 = vsmask.f32 7424
        %v1117 = vshrl.u32 %v1083, 16
        %v1119 = vshll.u32 %v1083, 16
        %v1121 = vrot.slane %v1119, 1
        %v1122 = vor.u32 %v1117, %v1121
        %v1124 = vshll.u32 %v1107, 16
        %v1126 = vrot.slane %v1124, 1
        %v1127 = vsel %vm1115, %v1122, %v1126
        %v1129 = vshrl.u32 %v1084, 16
        %v1131 = vshll.u32 %v1084, 16
        %v1133 = vrot.slane %v1131, 1
        %v1134 = vor.u32 %v1129, %v1133
        %v1136 = vshll.u32 %v1108, 16
        %v1138 = vrot.slane %v1136, 1
        %v1139 = vsel %vm1115, %v1134, %v1138
        %v1141 = vshrl.u32 %v1085, 16
        %v1143 = vshll.u32 %v1085, 16
        %v1145 = vrot.slane %v1143, 1
        %v1146 = vor.u32 %v1141, %v1145
        %v1148 = vshll.u32 %v1109, 16
        %v1150 = vrot.slane %v1148, 1
        %v1151 = vsel %vm1115, %v1146, %v1150
        %v1153 = vshrl.u32 %v1086, 16
        %v1155 = vshll.u32 %v1086, 16
        %v1157 = vrot.slane %v1155, 1
        %v1158 = vor.u32 %v1153, %v1157
        %v1160 = vshll.u32 %v1110, 16
        %v1162 = vrot.slane %v1160, 1
        %v1163 = vsel %vm1115, %v1158, %v1162
        %v1165 = vshrl.u32 %v1087, 16
        %v1167 = vshll.u32 %v1087, 16
        %v1169 = vrot.slane %v1167, 1
        %v1170 = vor.u32 %v1165, %v1169
        %v1172 = vshll.u32 %v1111, 16
        %v1174 = vrot.slane %v1172, 1
        %v1175 = vsel %vm1115, %v1170, %v1174
        %v1177 = vshrl.u32 %v1088, 16
        %v1179 = vshll.u32 %v1088, 16
        %v1181 = vrot.slane %v1179, 1
        %v1182 = vor.u32 %v1177, %v1181
        %v1184 = vshll.u32 %v1112, 16
        %v1186 = vrot.slane %v1184, 1
        %v1187 = vsel %vm1115, %v1182, %v1186
        %v1189 = vshrl.u32 %v1089, 16
        %v1191 = vshll.u32 %v1089, 16
        %v1193 = vrot.slane %v1191, 1
        %v1194 = vor.u32 %v1189, %v1193
        %v1196 = vshll.u32 %v1113, 16
        %v1198 = vrot.slane %v1196, 1
        %v1199 = vsel %vm1115, %v1194, %v1198
        %v1201 = vshrl.u32 %v1090, 16
        %v1203 = vshll.u32 %v1090, 16
        %v1205 = vrot.slane %v1203, 1
        %v1206 = vor.u32 %v1201, %v1205
        %v1208 = vshll.u32 %v1114, 16
        %v1210 = vrot.slane %v1208, 1
        %v1211 = vsel %vm1115, %v1206, %v1210
        %1212 = vrot.lane.b32.xlu0 %v1127, 4
        %v1213 = vpop.permute.xlu0 %1212
        %1214 = vrot.lane.b32.xlu0 %v1139, 4
        %v1215 = vpop.permute.xlu0 %1214
        %1216 = vrot.lane.b32.xlu0 %v1151, 4
        %v1217 = vpop.permute.xlu0 %1216
        %1218 = vrot.lane.b32.xlu0 %v1163, 4
        %v1219 = vpop.permute.xlu0 %1218
        %1220 = vrot.lane.b32.xlu0 %v1175, 4
        %v1221 = vpop.permute.xlu0 %1220
        %1222 = vrot.lane.b32.xlu0 %v1187, 4
        %v1223 = vpop.permute.xlu0 %1222
        %1224 = vrot.lane.b32.xlu0 %v1199, 4
        %v1225 = vpop.permute.xlu0 %1224
        %1226 = vrot.lane.b32.xlu0 %v1211, 4
        %v1227 = vpop.permute.xlu0 %1226
        %v1236 = vunpack.c.l.b16 %v978
        %v1237 = vunpack.c.l.b16 %v979
        %v1238 = vunpack.c.l.b16 %v980
        %v1239 = vunpack.c.l.b16 %v981
        %v1240 = vunpack.c.l.b16 %v982
        %v1241 = vunpack.c.l.b16 %v983
        %v1242 = vunpack.c.l.b16 %v984
        %v1243 = vunpack.c.l.b16 %v985
        %v1244 = vpack.c.b16 %v1068, %v1236
        %v1245 = vpack.c.b16 %v1070, %v1237
        %v1246 = vpack.c.b16 %v1072, %v1238
        %v1247 = vpack.c.b16 %v1074, %v1239
        %v1248 = vpack.c.b16 %v1076, %v1240
        %v1249 = vpack.c.b16 %v1078, %v1241
        %v1250 = vpack.c.b16 %v1080, %v1242
        %v1251 = vpack.c.b16 %v1082, %v1243
        %vm1252 = vcmask 1046528
        %v1253 = vrot.slane %v1244, 1
        %v1254 = vrot.slane %v1107, 1
        %v1255 = vsel %vm1252, %v1253, %v1254
        %v1256 = vrot.slane %v1245, 1
        %v1257 = vrot.slane %v1108, 1
        %v1258 = vsel %vm1252, %v1256, %v1257
        %v1259 = vrot.slane %v1246, 1
        %v1260 = vrot.slane %v1109, 1
        %v1261 = vsel %vm1252, %v1259, %v1260
        %v1262 = vrot.slane %v1247, 1
        %v1263 = vrot.slane %v1110, 1
        %v1264 = vsel %vm1252, %v1262, %v1263
        %v1265 = vrot.slane %v1248, 1
        %v1266 = vrot.slane %v1111, 1
        %v1267 = vsel %vm1252, %v1265, %v1266
        %v1268 = vrot.slane %v1249, 1
        %v1269 = vrot.slane %v1112, 1
        %v1270 = vsel %vm1252, %v1268, %v1269
        %v1271 = vrot.slane %v1250, 1
        %v1272 = vrot.slane %v1113, 1
        %v1273 = vsel %vm1252, %v1271, %v1272
        %v1274 = vrot.slane %v1251, 1
        %v1275 = vrot.slane %v1114, 1
        %v1276 = vsel %vm1252, %v1274, %v1275
        %1277 = vrot.lane.b32.xlu0 %v1255, 8
        %v1278 = vpop.permute.xlu0 %1277
        %1279 = vrot.lane.b32.xlu0 %v1258, 8
        %v1280 = vpop.permute.xlu0 %1279
        %1281 = vrot.lane.b32.xlu0 %v1261, 8
        %v1282 = vpop.permute.xlu0 %1281
        %1283 = vrot.lane.b32.xlu0 %v1264, 8
        %v1284 = vpop.permute.xlu0 %1283
        %1285 = vrot.lane.b32.xlu0 %v1267, 8
        %v1286 = vpop.permute.xlu0 %1285
        %1287 = vrot.lane.b32.xlu0 %v1270, 8
        %v1288 = vpop.permute.xlu0 %1287
        %1289 = vrot.lane.b32.xlu0 %v1273, 8
        %v1290 = vpop.permute.xlu0 %1289
        %1291 = vrot.lane.b32.xlu0 %v1276, 8
        %v1292 = vpop.permute.xlu0 %1291
        %v1309 = vunpack.c.l.b16 %v986
        %v1310 = vunpack.c.l.b16 %v987
        %v1311 = vunpack.c.l.b16 %v988
        %v1312 = vunpack.c.l.b16 %v989
        %v1313 = vunpack.c.l.b16 %v990
        %v1314 = vunpack.c.l.b16 %v991
        %v1315 = vunpack.c.l.b16 %v992
        %v1316 = vunpack.c.l.b16 %v993
        %v1317 = vunpack.c.l.b16 %v994
        %v1318 = vunpack.c.l.b16 %v995
        %v1319 = vunpack.c.l.b16 %v996
        %v1320 = vunpack.c.l.b16 %v997
        %v1321 = vunpack.c.l.b16 %v998
        %v1322 = vunpack.c.l.b16 %v999
        %v1323 = vunpack.c.l.b16 %v1000
        %v1324 = vunpack.c.l.b16 %v1001
        %v1325 = vpack.c.b16 %v1310, %v1309
        %v1326 = vpack.c.b16 %v1312, %v1311
        %v1327 = vpack.c.b16 %v1314, %v1313
        %v1328 = vpack.c.b16 %v1316, %v1315
        %v1329 = vpack.c.b16 %v1318, %v1317
        %v1330 = vpack.c.b16 %v1320, %v1319
        %v1331 = vpack.c.b16 %v1322, %v1321
        %v1332 = vpack.c.b16 %v1324, %v1323
        %1333 = vrot.lane.b32.xlu0 %v1325, 12
        %v1334 = vpop.permute.xlu0 %1333
        %1335 = vrot.lane.b32.xlu0 %v1326, 12
        %v1336 = vpop.permute.xlu0 %1335
        %1337 = vrot.lane.b32.xlu0 %v1327, 12
        %v1338 = vpop.permute.xlu0 %1337
        %1339 = vrot.lane.b32.xlu0 %v1328, 12
        %v1340 = vpop.permute.xlu0 %1339
        %1341 = vrot.lane.b32.xlu0 %v1329, 12
        %v1342 = vpop.permute.xlu0 %1341
        %1343 = vrot.lane.b32.xlu0 %v1330, 12
        %v1344 = vpop.permute.xlu0 %1343
        %1345 = vrot.lane.b32.xlu0 %v1331, 12
        %v1346 = vpop.permute.xlu0 %1345
        %1347 = vrot.lane.b32.xlu0 %v1332, 12
        %v1348 = vpop.permute.xlu0 %1347
        %v1357 = vunpack.c.l.b16 %v1002
        %v1358 = vunpack.c.l.b16 %v1003
        %v1359 = vunpack.c.l.b16 %v1004
        %v1360 = vunpack.c.l.b16 %v1005
        %v1361 = vunpack.c.l.b16 %v1006
        %v1362 = vunpack.c.l.b16 %v1007
        %v1363 = vunpack.c.l.b16 %v1008
        %v1364 = vunpack.c.l.b16 %v1009
        %v1365 = vpack.c.b16 %v1357, %v1357
        %v1366 = vpack.c.b16 %v1358, %v1358
        %v1367 = vpack.c.b16 %v1359, %v1359
        %v1368 = vpack.c.b16 %v1360, %v1360
        %v1369 = vpack.c.b16 %v1361, %v1361
        %v1370 = vpack.c.b16 %v1362, %v1362
        %v1371 = vpack.c.b16 %v1363, %v1363
        %v1372 = vpack.c.b16 %v1364, %v1364
        %v1374 = vshrl.u32 %v1325, 16
        %v1376 = vshll.u32 %v1325, 16
        %v1378 = vrot.slane %v1376, 1
        %v1379 = vor.u32 %v1374, %v1378
        %v1381 = vshll.u32 %v1365, 16
        %v1383 = vrot.slane %v1381, 1
        %v1384 = vsel %vm1115, %v1379, %v1383
        %v1386 = vshrl.u32 %v1326, 16
        %v1388 = vshll.u32 %v1326, 16
        %v1390 = vrot.slane %v1388, 1
        %v1391 = vor.u32 %v1386, %v1390
        %v1393 = vshll.u32 %v1366, 16
        %v1395 = vrot.slane %v1393, 1
        %v1396 = vsel %vm1115, %v1391, %v1395
        %v1398 = vshrl.u32 %v1327, 16
        %v1400 = vshll.u32 %v1327, 16
        %v1402 = vrot.slane %v1400, 1
        %v1403 = vor.u32 %v1398, %v1402
        %v1405 = vshll.u32 %v1367, 16
        %v1407 = vrot.slane %v1405, 1
        %v1408 = vsel %vm1115, %v1403, %v1407
        %v1410 = vshrl.u32 %v1328, 16
        %v1412 = vshll.u32 %v1328, 16
        %v1414 = vrot.slane %v1412, 1
        %v1415 = vor.u32 %v1410, %v1414
        %v1417 = vshll.u32 %v1368, 16
        %v1419 = vrot.slane %v1417, 1
        %v1420 = vsel %vm1115, %v1415, %v1419
        %v1422 = vshrl.u32 %v1329, 16
        %v1424 = vshll.u32 %v1329, 16
        %v1426 = vrot.slane %v1424, 1
        %v1427 = vor.u32 %v1422, %v1426
        %v1429 = vshll.u32 %v1369, 16
        %v1431 = vrot.slane %v1429, 1
        %v1432 = vsel %vm1115, %v1427, %v1431
        %v1434 = vshrl.u32 %v1330, 16
        %v1436 = vshll.u32 %v1330, 16
        %v1438 = vrot.slane %v1436, 1
        %v1439 = vor.u32 %v1434, %v1438
        %v1441 = vshll.u32 %v1370, 16
        %v1443 = vrot.slane %v1441, 1
        %v1444 = vsel %vm1115, %v1439, %v1443
        %v1446 = vshrl.u32 %v1331, 16
        %v1448 = vshll.u32 %v1331, 16
        %v1450 = vrot.slane %v1448, 1
        %v1451 = vor.u32 %v1446, %v1450
        %v1453 = vshll.u32 %v1371, 16
        %v1455 = vrot.slane %v1453, 1
        %v1456 = vsel %vm1115, %v1451, %v1455
        %v1458 = vshrl.u32 %v1332, 16
        %v1460 = vshll.u32 %v1332, 16
        %v1462 = vrot.slane %v1460, 1
        %v1463 = vor.u32 %v1458, %v1462
        %v1465 = vshll.u32 %v1372, 16
        %v1467 = vrot.slane %v1465, 1
        %v1468 = vsel %vm1115, %v1463, %v1467
        %1469 = vrot.lane.b32.xlu0 %v1384, 16
        %v1470 = vpop.permute.xlu0 %1469
        %1471 = vrot.lane.b32.xlu0 %v1396, 16
        %v1472 = vpop.permute.xlu0 %1471
        %1473 = vrot.lane.b32.xlu0 %v1408, 16
        %v1474 = vpop.permute.xlu0 %1473
        %1475 = vrot.lane.b32.xlu0 %v1420, 16
        %v1476 = vpop.permute.xlu0 %1475
        %1477 = vrot.lane.b32.xlu0 %v1432, 16
        %v1478 = vpop.permute.xlu0 %1477
        %1479 = vrot.lane.b32.xlu0 %v1444, 16
        %v1480 = vpop.permute.xlu0 %1479
        %1481 = vrot.lane.b32.xlu0 %v1456, 16
        %v1482 = vpop.permute.xlu0 %1481
        %1483 = vrot.lane.b32.xlu0 %v1468, 16
        %v1484 = vpop.permute.xlu0 %1483
        %v1493 = vunpack.c.l.b16 %v1010
        %v1494 = vunpack.c.l.b16 %v1011
        %v1495 = vunpack.c.l.b16 %v1012
        %v1496 = vunpack.c.l.b16 %v1013
        %v1497 = vunpack.c.l.b16 %v1014
        %v1498 = vunpack.c.l.b16 %v1015
        %v1499 = vunpack.c.l.b16 %v1016
        %v1500 = vunpack.c.l.b16 %v1017
        %v1501 = vpack.c.b16 %v1310, %v1493
        %v1502 = vpack.c.b16 %v1312, %v1494
        %v1503 = vpack.c.b16 %v1314, %v1495
        %v1504 = vpack.c.b16 %v1316, %v1496
        %v1505 = vpack.c.b16 %v1318, %v1497
        %v1506 = vpack.c.b16 %v1320, %v1498
        %v1507 = vpack.c.b16 %v1322, %v1499
        %v1508 = vpack.c.b16 %v1324, %v1500
        %v1509 = vrot.slane %v1501, 1
        %v1510 = vrot.slane %v1365, 1
        %v1511 = vsel %vm1252, %v1509, %v1510
        %v1512 = vrot.slane %v1502, 1
        %v1513 = vrot.slane %v1366, 1
        %v1514 = vsel %vm1252, %v1512, %v1513
        %v1515 = vrot.slane %v1503, 1
        %v1516 = vrot.slane %v1367, 1
        %v1517 = vsel %vm1252, %v1515, %v1516
        %v1518 = vrot.slane %v1504, 1
        %v1519 = vrot.slane %v1368, 1
        %v1520 = vsel %vm1252, %v1518, %v1519
        %v1521 = vrot.slane %v1505, 1
        %v1522 = vrot.slane %v1369, 1
        %v1523 = vsel %vm1252, %v1521, %v1522
        %v1524 = vrot.slane %v1506, 1
        %v1525 = vrot.slane %v1370, 1
        %v1526 = vsel %vm1252, %v1524, %v1525
        %v1527 = vrot.slane %v1507, 1
        %v1528 = vrot.slane %v1371, 1
        %v1529 = vsel %vm1252, %v1527, %v1528
        %v1530 = vrot.slane %v1508, 1
        %v1531 = vrot.slane %v1372, 1
        %v1532 = vsel %vm1252, %v1530, %v1531
        %1533 = vrot.lane.b32.xlu0 %v1511, 20
        %v1534 = vpop.permute.xlu0 %1533
        %1535 = vrot.lane.b32.xlu0 %v1514, 20
        %v1536 = vpop.permute.xlu0 %1535
        %1537 = vrot.lane.b32.xlu0 %v1517, 20
        %v1538 = vpop.permute.xlu0 %1537
        %1539 = vrot.lane.b32.xlu0 %v1520, 20
        %v1540 = vpop.permute.xlu0 %1539
        %1541 = vrot.lane.b32.xlu0 %v1523, 20
        %v1542 = vpop.permute.xlu0 %1541
        %1543 = vrot.lane.b32.xlu0 %v1526, 20
        %v1544 = vpop.permute.xlu0 %1543
        %1545 = vrot.lane.b32.xlu0 %v1529, 20
        %v1546 = vpop.permute.xlu0 %1545
        %1547 = vrot.lane.b32.xlu0 %v1532, 20
        %v1548 = vpop.permute.xlu0 %1547
        %v1565 = vunpack.c.l.b16 %v1019
        %v1566 = vunpack.c.l.b16 %v1020
        %v1567 = vunpack.c.l.b16 %v1021
        %v1568 = vunpack.c.l.b16 %v1022
        %v1569 = vunpack.c.l.b16 %v1023
        %v1570 = vunpack.c.l.b16 %v1024
        %v1571 = vunpack.c.l.b16 %v1025
        %v1572 = vunpack.c.l.b16 %v1026
        %v1573 = vunpack.c.l.b16 %v1027
        %v1574 = vunpack.c.l.b16 %v1028
        %v1575 = vunpack.c.l.b16 %v1029
        %v1576 = vunpack.c.l.b16 %v1030
        %v1577 = vunpack.c.l.b16 %v1031
        %v1578 = vunpack.c.l.b16 %v1032
        %v1579 = vunpack.c.l.b16 %v1033
        %v1580 = vunpack.c.l.b16 %v1034
        %v1581 = vpack.c.b16 %v1566, %v1565
        %v1582 = vpack.c.b16 %v1568, %v1567
        %v1583 = vpack.c.b16 %v1570, %v1569
        %v1584 = vpack.c.b16 %v1572, %v1571
        %v1585 = vpack.c.b16 %v1574, %v1573
        %v1586 = vpack.c.b16 %v1576, %v1575
        %v1587 = vpack.c.b16 %v1578, %v1577
        %v1588 = vpack.c.b16 %v1580, %v1579
        %1589 = vrot.lane.b32.xlu0 %v1581, 24
        %v1590 = vpop.permute.xlu0 %1589
        %1591 = vrot.lane.b32.xlu0 %v1582, 24
        %v1592 = vpop.permute.xlu0 %1591
        %1593 = vrot.lane.b32.xlu0 %v1583, 24
        %v1594 = vpop.permute.xlu0 %1593
        %1595 = vrot.lane.b32.xlu0 %v1584, 24
        %v1596 = vpop.permute.xlu0 %1595
        %1597 = vrot.lane.b32.xlu0 %v1585, 24
        %v1598 = vpop.permute.xlu0 %1597
        %1599 = vrot.lane.b32.xlu0 %v1586, 24
        %v1600 = vpop.permute.xlu0 %1599
        %1601 = vrot.lane.b32.xlu0 %v1587, 24
        %v1602 = vpop.permute.xlu0 %1601
        %1603 = vrot.lane.b32.xlu0 %v1588, 24
        %v1604 = vpop.permute.xlu0 %1603
        %v1613 = vunpack.c.l.b16 %v1035
        %v1614 = vunpack.c.l.b16 %v1036
        %v1615 = vunpack.c.l.b16 %v1037
        %v1616 = vunpack.c.l.b16 %v1038
        %v1617 = vunpack.c.l.b16 %v1039
        %v1618 = vunpack.c.l.b16 %v1040
        %v1619 = vunpack.c.l.b16 %v1041
        %v1620 = vunpack.c.l.b16 %v1042
        %v1621 = vpack.c.b16 %v1613, %v1613
        %v1622 = vpack.c.b16 %v1614, %v1614
        %v1623 = vpack.c.b16 %v1615, %v1615
        %v1624 = vpack.c.b16 %v1616, %v1616
        %v1625 = vpack.c.b16 %v1617, %v1617
        %v1626 = vpack.c.b16 %v1618, %v1618
        %v1627 = vpack.c.b16 %v1619, %v1619
        %v1628 = vpack.c.b16 %v1620, %v1620
        %v1630 = vshrl.u32 %v1581, 16
        %v1632 = vshll.u32 %v1581, 16
        %v1634 = vrot.slane %v1632, 1
        %v1635 = vor.u32 %v1630, %v1634
        %v1637 = vshll.u32 %v1621, 16
        %v1639 = vrot.slane %v1637, 1
        %v1640 = vsel %vm1115, %v1635, %v1639
        %v1642 = vshrl.u32 %v1582, 16
        %v1644 = vshll.u32 %v1582, 16
        %v1646 = vrot.slane %v1644, 1
        %v1647 = vor.u32 %v1642, %v1646
        %v1649 = vshll.u32 %v1622, 16
        %v1651 = vrot.slane %v1649, 1
        %v1652 = vsel %vm1115, %v1647, %v1651
        %v1654 = vshrl.u32 %v1583, 16
        %v1656 = vshll.u32 %v1583, 16
        %v1658 = vrot.slane %v1656, 1
        %v1659 = vor.u32 %v1654, %v1658
        %v1661 = vshll.u32 %v1623, 16
        %v1663 = vrot.slane %v1661, 1
        %v1664 = vsel %vm1115, %v1659, %v1663
        %v1666 = vshrl.u32 %v1584, 16
        %v1668 = vshll.u32 %v1584, 16
        %v1670 = vrot.slane %v1668, 1
        %v1671 = vor.u32 %v1666, %v1670
        %v1673 = vshll.u32 %v1624, 16
        %v1675 = vrot.slane %v1673, 1
        %v1676 = vsel %vm1115, %v1671, %v1675
        %v1678 = vshrl.u32 %v1585, 16
        %v1680 = vshll.u32 %v1585, 16
        %v1682 = vrot.slane %v1680, 1
        %v1683 = vor.u32 %v1678, %v1682
        %v1685 = vshll.u32 %v1625, 16
        %v1687 = vrot.slane %v1685, 1
        %v1688 = vsel %vm1115, %v1683, %v1687
        %v1690 = vshrl.u32 %v1586, 16
        %v1692 = vshll.u32 %v1586, 16
        %v1694 = vrot.slane %v1692, 1
        %v1695 = vor.u32 %v1690, %v1694
        %v1697 = vshll.u32 %v1626, 16
        %v1699 = vrot.slane %v1697, 1
        %v1700 = vsel %vm1115, %v1695, %v1699
        %v1702 = vshrl.u32 %v1587, 16
        %v1704 = vshll.u32 %v1587, 16
        %v1706 = vrot.slane %v1704, 1
        %v1707 = vor.u32 %v1702, %v1706
        %v1709 = vshll.u32 %v1627, 16
        %v1711 = vrot.slane %v1709, 1
        %v1712 = vsel %vm1115, %v1707, %v1711
        %v1714 = vshrl.u32 %v1588, 16
        %v1716 = vshll.u32 %v1588, 16
        %v1718 = vrot.slane %v1716, 1
        %v1719 = vor.u32 %v1714, %v1718
        %v1721 = vshll.u32 %v1628, 16
        %v1723 = vrot.slane %v1721, 1
        %v1724 = vsel %vm1115, %v1719, %v1723
        %1725 = vrot.lane.b32.xlu0 %v1640, 28
        %v1726 = vpop.permute.xlu0 %1725
        %1727 = vrot.lane.b32.xlu0 %v1652, 28
        %v1728 = vpop.permute.xlu0 %1727
        %1729 = vrot.lane.b32.xlu0 %v1664, 28
        %v1730 = vpop.permute.xlu0 %1729
        %1731 = vrot.lane.b32.xlu0 %v1676, 28
        %v1732 = vpop.permute.xlu0 %1731
        %1733 = vrot.lane.b32.xlu0 %v1688, 28
        %v1734 = vpop.permute.xlu0 %1733
        %1735 = vrot.lane.b32.xlu0 %v1700, 28
        %v1736 = vpop.permute.xlu0 %1735
        %1737 = vrot.lane.b32.xlu0 %v1712, 28
        %v1738 = vpop.permute.xlu0 %1737
        %1739 = vrot.lane.b32.xlu0 %v1724, 28
        %v1740 = vpop.permute.xlu0 %1739
        %v1749 = vunpack.c.l.b16 %v1043
        %v1750 = vunpack.c.l.b16 %v1044
        %v1751 = vunpack.c.l.b16 %v1045
        %v1752 = vunpack.c.l.b16 %v1046
        %v1753 = vunpack.c.l.b16 %v1047
        %v1754 = vunpack.c.l.b16 %v1048
        %v1755 = vunpack.c.l.b16 %v1049
        %v1756 = vunpack.c.l.b16 %v1050
        %v1757 = vpack.c.b16 %v1566, %v1749
        %v1758 = vpack.c.b16 %v1568, %v1750
        %v1759 = vpack.c.b16 %v1570, %v1751
        %v1760 = vpack.c.b16 %v1572, %v1752
        %v1761 = vpack.c.b16 %v1574, %v1753
        %v1762 = vpack.c.b16 %v1576, %v1754
        %v1763 = vpack.c.b16 %v1578, %v1755
        %v1764 = vpack.c.b16 %v1580, %v1756
        %v1765 = vrot.slane %v1757, 1
        %v1766 = vrot.slane %v1621, 1
        %v1767 = vsel %vm1252, %v1765, %v1766
        %v1768 = vrot.slane %v1758, 1
        %v1769 = vrot.slane %v1622, 1
        %v1770 = vsel %vm1252, %v1768, %v1769
        %v1771 = vrot.slane %v1759, 1
        %v1772 = vrot.slane %v1623, 1
        %v1773 = vsel %vm1252, %v1771, %v1772
        %v1774 = vrot.slane %v1760, 1
        %v1775 = vrot.slane %v1624, 1
        %v1776 = vsel %vm1252, %v1774, %v1775
        %v1777 = vrot.slane %v1761, 1
        %v1778 = vrot.slane %v1625, 1
        %v1779 = vsel %vm1252, %v1777, %v1778
        %v1780 = vrot.slane %v1762, 1
        %v1781 = vrot.slane %v1626, 1
        %v1782 = vsel %vm1252, %v1780, %v1781
        %v1783 = vrot.slane %v1763, 1
        %v1784 = vrot.slane %v1627, 1
        %v1785 = vsel %vm1252, %v1783, %v1784
        %v1786 = vrot.slane %v1764, 1
        %v1787 = vrot.slane %v1628, 1
        %v1788 = vsel %vm1252, %v1786, %v1787
        %1789 = vrot.lane.b32.xlu0 %v1767, 32
        %v1790 = vpop.permute.xlu0 %1789
        %1791 = vrot.lane.b32.xlu0 %v1770, 32
        %v1792 = vpop.permute.xlu0 %1791
        %1793 = vrot.lane.b32.xlu0 %v1773, 32
        %v1794 = vpop.permute.xlu0 %1793
        %1795 = vrot.lane.b32.xlu0 %v1776, 32
        %v1796 = vpop.permute.xlu0 %1795
        %1797 = vrot.lane.b32.xlu0 %v1779, 32
        %v1798 = vpop.permute.xlu0 %1797
        %1799 = vrot.lane.b32.xlu0 %v1782, 32
        %v1800 = vpop.permute.xlu0 %1799
        %1801 = vrot.lane.b32.xlu0 %v1785, 32
        %v1802 = vpop.permute.xlu0 %1801
        %1803 = vrot.lane.b32.xlu0 %v1788, 32
        %v1804 = vpop.permute.xlu0 %1803
        %vm1805 = vcmask 31744
        %v1807 = vsel %vm1805, %v1083, %v1213
        %v1809 = vsel %vm1805, %v1084, %v1215
        %v1811 = vsel %vm1805, %v1085, %v1217
        %v1813 = vsel %vm1805, %v1086, %v1219
        %v1815 = vsel %vm1805, %v1087, %v1221
        %v1817 = vsel %vm1805, %v1088, %v1223
        %v1819 = vsel %vm1805, %v1089, %v1225
        %v1821 = vsel %vm1805, %v1090, %v1227
        %vm1822 = vcmask 64512
        %v1824 = vsel %vm1822, %v1807, %v1278
        %v1826 = vsel %vm1822, %v1809, %v1280
        %v1828 = vsel %vm1822, %v1811, %v1282
        %v1830 = vsel %vm1822, %v1813, %v1284
        %v1832 = vsel %vm1822, %v1815, %v1286
        %v1834 = vsel %vm1822, %v1817, %v1288
        %v1836 = vsel %vm1822, %v1819, %v1290
        %v1838 = vsel %vm1822, %v1821, %v1292
        %vm1839 = vcmask 97280
        %v1841 = vsel %vm1839, %v1824, %v1334
        %v1843 = vsel %vm1839, %v1826, %v1336
        %v1845 = vsel %vm1839, %v1828, %v1338
        %v1847 = vsel %vm1839, %v1830, %v1340
        %v1849 = vsel %vm1839, %v1832, %v1342
        %v1851 = vsel %vm1839, %v1834, %v1344
        %v1853 = vsel %vm1839, %v1836, %v1346
        %v1855 = vsel %vm1839, %v1838, %v1348
        %vm1856 = vcmask 130048
        %v1858 = vsel %vm1856, %v1841, %v1470
        %v1860 = vsel %vm1856, %v1843, %v1472
        %v1862 = vsel %vm1856, %v1845, %v1474
        %v1864 = vsel %vm1856, %v1847, %v1476
        %v1866 = vsel %vm1856, %v1849, %v1478
        %v1868 = vsel %vm1856, %v1851, %v1480
        %v1870 = vsel %vm1856, %v1853, %v1482
        %v1872 = vsel %vm1856, %v1855, %v1484
        %vm1873 = vcmask 162816
        %v1875 = vsel %vm1873, %v1858, %v1534
        %v1877 = vsel %vm1873, %v1860, %v1536
        %v1879 = vsel %vm1873, %v1862, %v1538
        %v1881 = vsel %vm1873, %v1864, %v1540
        %v1883 = vsel %vm1873, %v1866, %v1542
        %v1885 = vsel %vm1873, %v1868, %v1544
        %v1887 = vsel %vm1873, %v1870, %v1546
        %v1889 = vsel %vm1873, %v1872, %v1548
        %vm1890 = vcmask 195584
        %v1892 = vsel %vm1890, %v1875, %v1590
        %v1894 = vsel %vm1890, %v1877, %v1592
        %v1896 = vsel %vm1890, %v1879, %v1594
        %v1898 = vsel %vm1890, %v1881, %v1596
        %v1900 = vsel %vm1890, %v1883, %v1598
        %v1902 = vsel %vm1890, %v1885, %v1600
        %v1904 = vsel %vm1890, %v1887, %v1602
        %v1906 = vsel %vm1890, %v1889, %v1604
        %vm1907 = vcmask 228352
        %v1909 = vsel %vm1907, %v1892, %v1726
        %v1911 = vsel %vm1907, %v1894, %v1728
        %v1913 = vsel %vm1907, %v1896, %v1730
        %v1915 = vsel %vm1907, %v1898, %v1732
        %v1917 = vsel %vm1907, %v1900, %v1734
        %v1919 = vsel %vm1907, %v1902, %v1736
        %v1921 = vsel %vm1907, %v1904, %v1738
        %v1923 = vsel %vm1907, %v1906, %v1740
        %vm1924 = vcmask 261120
        %v1926 = vsel %vm1924, %v1909, %v1790
        %v1928 = vsel %vm1924, %v1911, %v1792
        %v1930 = vsel %vm1924, %v1913, %v1794
        %v1932 = vsel %vm1924, %v1915, %v1796
        %v1934 = vsel %vm1924, %v1917, %v1798
        %v1936 = vsel %vm1924, %v1919, %v1800
        %v1938 = vsel %vm1924, %v1921, %v1802
        %v1940 = vsel %vm1924, %v1923, %v1804
        %v1941 = vld [vmem:[%s5] sm:$0xf]
        %v1942 = vld [vmem:[%s5 + $0x4] sm:$0xf]
        %v1943 = vld [vmem:[%s5 + $0x8] sm:$0xf]
        %v1944 = vld [vmem:[%s5 + $0xc] sm:$0xf]
        %v1945 = vld [vmem:[%s5 + $0x10] sm:$0x3]
        %v1946 = vld [vmem:[%s6] sm:$0x1]
        %v1948 = vperm.slane %v1946, 0
        %v1955 = vunpack.c.l.b16 %v1941
        %v1956 = vunpack.c.l.b16 %v1942
        %v1957 = vunpack.c.l.b16 %v1943
        %v1958 = vunpack.c.l.b16 %v1944
        %v1959 = vunpack.c.l.b16 %v1945
        %v1960 = vpack.c.b16 %v1956, %v1955
        %v1961 = vpack.c.b16 %v1958, %v1957
        %v1962 = vpack.c.b16 %v1959, %v1959
        %vm1965 = vcmask 293888
        %v1966 = vsel %vm1965, %v1926, 0
        %v1968 = vsel %vm1965, %v1928, 0
        %v1970 = vsel %vm1965, %v1930, 0
        %v1972 = vsel %vm1965, %v1932, 0
        %v1974 = vsel %vm1965, %v1934, 0
        %v1976 = vsel %vm1965, %v1936, 0
        %v1978 = vsel %vm1965, %v1938, 0
        %v1980 = vsel %vm1965, %v1940, 0
        %vm1982 = vcmask 1041408
        %v1984 = vsel %vm1982, %v1962, 0
        %1986 = vmatpush.bf16.msra.mxu0 0
        %1987 = vmatpush.bf16.msra.mxu0 0
        %1988 = vmatpush.bf16.msra.mxu0 0
        %1989 = vmatpush.bf16.msra.mxu0 0
        %1990 = vmatpush.bf16.msra.mxu0 0
        %1991 = vmatpush.bf16.msra.mxu0 %v1984
        %1992 = vmatpush.bf16.msra.mxu0 %v1961
        %1993 = vmatpush.bf16.msra.mxu0 %v1960
        %1994 = vmatmul.bf16.gmra.mxu0 %v1966
        %v1995 = vpop.f32.mrf.mxu0
        %v1996 = vadd.f32 %v1948, %v1995
        %v1997 = vpop.f32.mrf.mxu0
        %v1998 = vadd.f32 %v1948, %v1997
        %1999 = vmatmul.bf16.gmra.mxu0 %v1968
        %v2000 = vpop.f32.mrf.mxu0
        %v2001 = vadd.f32 %v1948, %v2000
        %v2002 = vpop.f32.mrf.mxu0
        %v2003 = vadd.f32 %v1948, %v2002
        %2004 = vmatmul.bf16.gmra.mxu0 %v1970
        %v2005 = vpop.f32.mrf.mxu0
        %v2006 = vadd.f32 %v1948, %v2005
        %v2007 = vpop.f32.mrf.mxu0
        %v2008 = vadd.f32 %v1948, %v2007
        %2009 = vmatmul.bf16.gmra.mxu0 %v1972
        %v2010 = vpop.f32.mrf.mxu0
        %v2011 = vadd.f32 %v1948, %v2010
        %v2012 = vpop.f32.mrf.mxu0
        %v2013 = vadd.f32 %v1948, %v2012
        %2014 = vmatmul.bf16.gmra.mxu0 %v1974
        %v2015 = vpop.f32.mrf.mxu0
        %v2016 = vadd.f32 %v1948, %v2015
        %v2017 = vpop.f32.mrf.mxu0
        %v2018 = vadd.f32 %v1948, %v2017
        %2019 = vmatmul.bf16.gmra.mxu0 %v1976
        %v2020 = vpop.f32.mrf.mxu0
        %v2021 = vadd.f32 %v1948, %v2020
        %v2022 = vpop.f32.mrf.mxu0
        %v2023 = vadd.f32 %v1948, %v2022
        %2024 = vmatmul.bf16.gmra.mxu0 %v1978
        %v2025 = vpop.f32.mrf.mxu0
        %v2026 = vadd.f32 %v1948, %v2025
        %v2027 = vpop.f32.mrf.mxu0
        %v2028 = vadd.f32 %v1948, %v2027
        %2029 = vmatmul.bf16.gmra.mxu0 %v1980
        %v2030 = vpop.f32.mrf.mxu0
        %v2031 = vadd.f32 %v1948, %v2030
        %v2032 = vpop.f32.mrf.mxu0
        %v2033 = vadd.f32 %v1948, %v2032
        %2034 = vdwg.mxu0
        %2035 = vst [vmem:[%s388] sm:$0xff] %v1996
        %2036 = vst [vmem:[%s388 + $0x8] sm:$0xff] %v1998
        %2037 = vst [vmem:[%s388 + $0x10] sm:$0xff] %v2001
        %2038 = vst [vmem:[%s388 + $0x18] sm:$0xff] %v2003
        %2039 = vst [vmem:[%s388 + $0x20] sm:$0xff] %v2006
        %2040 = vst [vmem:[%s388 + $0x28] sm:$0xff] %v2008
        %2041 = vst [vmem:[%s388 + $0x30] sm:$0xff] %v2011
        %2042 = vst [vmem:[%s388 + $0x38] sm:$0xff] %v2013
        %2043 = vst [vmem:[%s388 + $0x40] sm:$0xff] %v2016
        %2044 = vst [vmem:[%s388 + $0x48] sm:$0xff] %v2018
        %2045 = vst [vmem:[%s388 + $0x50] sm:$0xff] %v2021
        %2046 = vst [vmem:[%s388 + $0x58] sm:$0xff] %v2023
        %2047 = vst [vmem:[%s388 + $0x60] sm:$0xff] %v2026
        %2048 = vst [vmem:[%s388 + $0x68] sm:$0xff] %v2028
        %2049 = vst [vmem:[%s388 + $0x70] sm:$0xff] %v2031
        %2050 = vst [vmem:[%s388 + $0x78] sm:$0xff] %v2033
        %s2051 = sand.u32 %s227, 1
        %s2052 = scalar_lea.sflag [#allocation4], %s2051
        %s2053 = sand.u32 %s227, 1
        %s2054 = smul.addr %s2053, 128
        %s2055 = scalar_lea.vmem [#allocation3], %s2054
        // Predicated region
        $region49: #{tpu_custom_call.1} parent=47 // pred_check
          %p2056 = pneg %p237
        $region50: #{tpu_custom_call.1} parent=47 // pred_check_branch
          %2058 = sbr.rel (%p2056) target = $region52
        $region51: #{tpu_custom_call.1} parent=47 // pred_region
          %s2059 = smul.u32 8, %s26
          %2061 = vsyncadd %s2052, 0
          %s2062 = smul.addr %s2059, 2
          %s2063 = smul.addr %s25, 32
          %s2064 = sadd.s32 %s2062, %s2063
          %s2065 = smul.addr %s2064, 8
          %s2066 = scalar_lea.hbm %s7, %s2065
          %s2067 = sshll.u32 %s2055, 4
          %s2068 = int_to_ptr.vmem [resolvable:$true] %s2067
          %s2069 = sshll.u32 %s2066, 4
          %s2070 = int_to_ptr.hbm [resolvable:$true] %s2069
          %2075 = dma.vmem_to_hbm [thread:$0]  %s2068, 2048, %s2070, %s2052, 128, 128, 8
        $region52: #{tpu_custom_call.1} parent=47 // pred_fallthru
          _
      $region48: #{tpu_custom_call.1} parent=5 // pred_fallthru
        _
      %p2076 = scmp.le.s32.totalorder 2, %s16
      // Predicated region
      $region53: #{tpu_custom_call.1} parent=5 // pred_check
        %p2077 = pneg %p2076
      $region54: #{tpu_custom_call.1} parent=5 // pred_check_branch
        %2079 = sbr.rel (%p2077) target = $region56
      $region55: #{tpu_custom_call.1} parent=5 // pred_region
        %s2080 = ssub.s32 %s16, 2
        // Predicated region
        $region57: #{tpu_custom_call.1} parent=55 // pred_check
          %p2081 = pneg %p243
        $region58: #{tpu_custom_call.1} parent=55 // pred_check_branch
          %2083 = sbr.rel (%p2081) target = $region60
        $region59: #{tpu_custom_call.1} parent=55 // pred_region
          %s2084 = sand.u32 %s228, 1
          %s2085 = scalar_lea.sflag [#allocation4], %s2084
          %s2086 = sand.u32 %s228, 1
          %s2087 = smul.addr %s2086, 128
          %s2088 = scalar_lea.vmem [#allocation3], %s2087
          %2090 = dma.done %s2085, 2048
        $region60: #{tpu_custom_call.1} parent=55 // pred_fallthru
          _
      $region56: #{tpu_custom_call.1} parent=5 // pred_fallthru
        _
    $region6: #{tpu_custom_call.1} parent=1 // loop_footer
      %s20 = sadd.s32 1, %s16
    $region7: #{tpu_custom_call.1} parent=1 // loop_footer_branch
      %15 = sbr.rel target = $region3
    $region8: #{tpu_custom_call.1} parent=1 // loop_exit
      _
    %2091 = vsyncpa [#allocation4], 1
    %s2092 = scalar_lea.sflag [#allocation4], 1
    %2093 = vsyncpa %s2092, 1

</llo_original>
